<compile_context>
chip_gen: v5e
topology: v5e:2x2
jax: 0.10.0
libtpu: 0.0.40
codegen_flags: <defaults>
</compile_context>

<pallas_src>
import functools

import jax
import jax.numpy as jnp
import numpy as np
from jax.experimental import pallas as pl
from jax.experimental.pallas import tpu as pltpu

K = 7          # conv kernel size
PAD = 3        # conv padding


def _ssa_kernel(H, W, w_ref, shift_ref, coords_ref, eh_ref, er_ref, out_ref):
    """One batch element per grid step.

    w_ref      : VMEM (4, K*K) f32  conv weights (BN scale folded), one sublane
                 row per stacked map: [EH-mean, ER-mean, EH-max, ER-max]
    shift_ref  : SMEM (2,) f32      BN shift per path [EH, ER]
    coords_ref : VMEM (2, H*W) f32  row 0: column index, row 1: row index of
                 each flat spatial position
    eh_ref, er_ref, out_ref : VMEM (1, C, H*W)
    """
    HW = H * W

    e_h = eh_ref[0]                                  # (C, HW), input dtype
    e_r = er_ref[0]
    ehf = e_h.astype(jnp.float32)                    # stats / conv in f32
    erf = e_r.astype(jnp.float32)

    # Stacked channel-reduced maps, one sublane row each, so the conv below
    # runs once over all four maps (paths are pair-summed at the end).
    maps = jnp.concatenate(
        [jnp.mean(ehf, axis=0, keepdims=True),       # row 0: mean(E_H)
         jnp.mean(erf, axis=0, keepdims=True),       # row 1: mean(E_R)
         jnp.max(ehf, axis=0, keepdims=True),        # row 2: max(E_H)
         jnp.max(erf, axis=0, keepdims=True)],       # row 3: max(E_R)
        axis=0)                                      # (4, HW) f32

    col_idx = coords_ref[pl.ds(0, 1), :]             # (1, HW) f32: j % W
    row_idx = coords_ref[pl.ds(1, 1), :]             # (1, HW) f32: j // W
    w_all = w_ref[...]                               # (4, K*K) f32, one vreg

    # Zero-padded 7x7 conv on the flat maps, factored as
    #   row_acc[dy] = sum_dx w[:, dy*K+dx] * colroll(maps, dx)          (4, HW)
    #   logits      = sum_dy rowmask(dy) * rowroll(pairsum(row_acc[dy]), dy)
    # A (dy, dx) shift of a flat map is a lane roll by (dy-3)*W + (dx-3); conv
    # zero padding (and lane-roll wraparound) is killed by coordinate masks
    # generated in-kernel from the flat col/row indices (2 compares + a cast).
    # Loops are unrolled; for very large H*W tiles switch to lax.fori_loop to
    # cap live ranges.
    row_acc = [None] * K
    for dx in range(K):
        ox = dx - PAD
        s = maps
        if ox != 0:                                  # center tap: no roll/mask
            s = pltpu.roll(s, (-ox) % HW, axis=1)
            cj = col_idx + float(ox)
            cm = jnp.logical_and(cj >= 0.0, cj < float(W)).astype(jnp.float32)
            s = s * cm                               # (1,HW) broadcast over 4 rows
        for dy in range(K):
            t = dy * K + dx
            wv = w_all[:, t:t + 1]                   # (4, 1) per-row tap weight
            term = s * wv                            # lane-broadcast multiply
            row_acc[dy] = term if row_acc[dy] is None else row_acc[dy] + term

    logits = None                                    # (2, HW): [EH path, ER path]
    for dy in range(K):
        oy = dy - PAD
        acc4 = row_acc[dy]
        r = acc4[0:2, :] + acc4[2:4, :]              # pair-sum mean+max per path
        if oy != 0:                                  # center tap: no roll/mask
            r = pltpu.roll(r, (-oy * W) % HW, axis=1)
            ri = row_idx + float(oy)
            rm = jnp.logical_and(ri >= 0.0, ri < float(H)).astype(jnp.float32)
            r = r * rm
        logits = r if logits is None else logits + r

    mask_eh = jax.nn.sigmoid(logits[0:1, :] + shift_ref[0])   # (1, HW) f32
    mask_er = jax.nn.sigmoid(logits[1:2, :] + shift_ref[1])

    # Bulk multiply stays in the input dtype (bf16-friendly), broadcast over C.
    out = e_h * mask_eh.astype(e_h.dtype) + e_r * mask_er.astype(e_r.dtype)
    out_ref[0] = out.astype(out_ref.dtype)


def _flat_coords(H, W):
    """(2, H*W) f32: row 0 = column index, row 1 = row index, row-major flat."""
    j = np.arange(H * W)
    return np.stack([(j % W).astype(np.float32),
                     (j // W).astype(np.float32)], axis=0)


@jax.jit
def ssa_pallas(e_h, e_r, w_eh, w_er, bn_scale, bn_shift):
    """e_h, e_r: (B, C, H, W).  w_eh, w_er: (1, 2, K, K) conv weights.
    bn_scale, bn_shift: (2,) inference-mode BN scale/shift per path [EH, ER]."""
    B, C, H, W = e_h.shape
    HW = H * W

    # Lane-dense layout for the bulk traffic (free bitcast reshape).
    e_h_flat = e_h.reshape(B, C, HW)
    e_r_flat = e_r.reshape(B, C, HW)

    # Fold the BN scale into the conv weights; stack one sublane row per map in
    # the same order as the stacked maps: [EH-mean, ER-mean, EH-max, ER-max].
    w_eh_eff = (w_eh[0] * bn_scale[0]).astype(jnp.float32)      # (2, K, K)
    w_er_eff = (w_er[0] * bn_scale[1]).astype(jnp.float32)
    w_stacked = jnp.stack(
        [w_eh_eff[0], w_er_eff[0], w_eh_eff[1], w_er_eff[1]], axis=0
    ).reshape(4, K * K)

    coords = jnp.asarray(_flat_coords(H, W))                    # (2, HW) f32
    shift = bn_shift.astype(jnp.float32)

    # VMEM budget derived from actual block sizes (never request the whole
    # physical VMEM -- 64 MiB is all of it on v7x).
    io_bytes = 3 * C * HW * e_h.dtype.itemsize     # E_H + E_R + out blocks
    est = (2 * io_bytes                            # double-buffered I/O blocks
           + 2 * 8 * HW * 4                        # coords (sublane-padded, x2)
           + (6 + 4 * K) * HW * 4                  # in-kernel f32 temps
           + (1 << 20))                            # weights + misc slack
    try:
        vmem_cap = pltpu.get_tpu_info().vmem_capacity_bytes
    except Exception:
        vmem_cap = 64 * 1024 * 1024
    vmem_limit = int(max(32 * 1024 * 1024,
                         min(int(1.5 * est), int(0.85 * vmem_cap))))

    grid_spec = pltpu.PrefetchScalarGridSpec(
        num_scalar_prefetch=0,
        grid=(B,),
        in_specs=[
            pl.BlockSpec((4, K * K), lambda b: (0, 0)),             # conv weights
            pl.BlockSpec(memory_space=pltpu.MemorySpace.SMEM),      # BN shift
            pl.BlockSpec((2, HW), lambda b: (0, 0)),                # flat coords
            pl.BlockSpec((1, C, HW), lambda b: (b, 0, 0)),          # E_H
            pl.BlockSpec((1, C, HW), lambda b: (b, 0, 0)),          # E_R
        ],
        out_specs=pl.BlockSpec((1, C, HW), lambda b: (b, 0, 0)),
    )

    out_flat = pl.pallas_call(
        functools.partial(_ssa_kernel, H, W),
        out_shape=jax.ShapeDtypeStruct((B, C, HW), e_h.dtype),
        grid_spec=grid_spec,
        compiler_params=pltpu.CompilerParams(
            dimension_semantics=("parallel",),
            vmem_limit_bytes=vmem_limit,
        ),
    )(w_stacked, shift, coords, e_h_flat, e_r_flat)

    return out_flat.reshape(B, C, H, W)


def ssa_reference(e_h, e_r, w_eh, w_er, bn_scale, bn_shift):
    """Pure-JAX reference (conv_general_dilated), BN in inference mode."""
    def path(x, w, sc, sh):
        ch_mean = jnp.mean(x, axis=1, keepdims=True)
        ch_max = jnp.max(x, axis=1, keepdims=True)
        cat = jnp.concatenate([ch_mean, ch_max], axis=1)          # (B,2,H,W)
        conv = jax.lax.conv_general_dilated(
            cat, w, window_strides=(1, 1), padding=[(PAD, PAD), (PAD, PAD)],
            dimension_numbers=("NCHW", "OIHW", "NCHW"))
        bn = conv * sc + sh
        return x * jax.nn.sigmoid(bn)

    return (path(e_h, w_eh, bn_scale[0], bn_shift[0])
            + path(e_r, w_er, bn_scale[1], bn_shift[1]))


if __name__ == "__main__":
    key = jax.random.PRNGKey(0)
    k_eh, k_er, k_x1, k_x2 = jax.random.split(key, 4)

    B, C, H, W = 2, 4, 16, 16
    e_h = jax.random.normal(k_x1, (B, C, H, W), jnp.float32)
    e_r = jax.random.normal(k_x2, (B, C, H, W), jnp.float32)

    # Conv2d(2 -> 1, 7x7, bias=False) weights, deterministic init.
    w_eh = jax.random.normal(k_eh, (1, 2, K, K), jnp.float32) * 0.1
    w_er = jax.random.normal(k_er, (1, 2, K, K), jnp.float32) * 0.1

    # BatchNorm2d(1) inference-mode parameters (deterministic), per path.
    eps = 1e-5
    gamma = jnp.array([1.2, 0.9], jnp.float32)           # [EH path, ER path]
    beta = jnp.array([0.10, -0.05], jnp.float32)
    running_mean = jnp.array([0.05, -0.02], jnp.float32)
    running_var = jnp.array([0.80, 1.10], jnp.float32)
    bn_scale = gamma / jnp.sqrt(running_var + eps)
    bn_shift = beta - running_mean * bn_scale

    out = ssa_pallas(e_h, e_r, w_eh, w_er, bn_scale, bn_shift)
    out = jax.block_until_ready(out)

    ref = ssa_reference(e_h, e_r, w_eh, w_er, bn_scale, bn_shift)
    np.testing.assert_allclose(np.asarray(out), np.asarray(ref), atol=1e-4, rtol=1e-4)

    print("KERNEL_OK")
</pallas_src>

<mosaic_0001>
module attributes {stable_mosaic.version = 11 : i64} {
  func.func @_ssa_kernel(%arg0: i32, %arg1: memref<4x49xf32, #tpu.memory_space<vmem>>, %arg2: memref<2xf32, #tpu.memory_space<smem>>, %arg3: memref<2x256xf32, #tpu.memory_space<vmem>>, %arg4: memref<1x4x256xf32, #tpu.memory_space<vmem>>, %arg5: memref<1x4x256xf32, #tpu.memory_space<vmem>>, %arg6: memref<1x4x256xf32, #tpu.memory_space<vmem>>) attributes {dimension_semantics = [#tpu.dimension_semantics<parallel>], iteration_bounds = array<i64: 2>, scalar_prefetch = 0 : i64, scratch_operands = 0 : i64, tpu.core_type = #tpu.core_type<tc>, window_params = [{pipeline_mode = #tpu.pipeline_mode<synchronous>, transform_indices = @transform_0, window_bounds = array<i64: 4, 49>}, {transform_indices = @transform_1, window_bounds = array<i64: 2>}, {pipeline_mode = #tpu.pipeline_mode<synchronous>, transform_indices = @transform_2, window_bounds = array<i64: 2, 256>}, {transform_indices = @transform_3, window_bounds = array<i64: 1, 4, 256>}, {transform_indices = @transform_4, window_bounds = array<i64: 1, 4, 256>}, {transform_indices = @transform_5, window_bounds = array<i64: 1, 4, 256>}]} {
    %c0 = arith.constant 0 : index
    %c0_0 = arith.constant 0 : index
    %c0_1 = arith.constant 0 : index
    %0 = vector.load %arg4[%c0, %c0_0, %c0_1] : memref<1x4x256xf32, #tpu.memory_space<vmem>>, vector<1x4x256xf32>
    %1 = vector.shape_cast %0 : vector<1x4x256xf32> to vector<4x256xf32>
    %c0_2 = arith.constant 0 : index
    %c0_3 = arith.constant 0 : index
    %c0_4 = arith.constant 0 : index
    %2 = vector.load %arg5[%c0_2, %c0_3, %c0_4] : memref<1x4x256xf32, #tpu.memory_space<vmem>>, vector<1x4x256xf32>
    %3 = vector.shape_cast %2 : vector<1x4x256xf32> to vector<4x256xf32>
    %cst = arith.constant dense<0.000000e+00> : vector<256xf32>
    %4 = vector.multi_reduction <add>, %1, %cst [0] : vector<4x256xf32> to vector<256xf32>
    %5 = vector.shape_cast %4 : vector<256xf32> to vector<1x256xf32>
    %cst_5 = arith.constant 4.000000e+00 : f32
    %6 = vector.broadcast %cst_5 : f32 to vector<1x256xf32>
    %7 = arith.divf %5, %6 : vector<1x256xf32>
    %cst_6 = arith.constant dense<0.000000e+00> : vector<256xf32>
    %8 = vector.multi_reduction <add>, %3, %cst_6 [0] : vector<4x256xf32> to vector<256xf32>
    %9 = vector.shape_cast %8 : vector<256xf32> to vector<1x256xf32>
    %cst_7 = arith.constant 4.000000e+00 : f32
    %10 = vector.broadcast %cst_7 : f32 to vector<1x256xf32>
    %11 = arith.divf %9, %10 : vector<1x256xf32>
    %cst_8 = arith.constant dense<0xFF800000> : vector<256xf32>
    %12 = vector.multi_reduction <maximumf>, %1, %cst_8 [0] : vector<4x256xf32> to vector<256xf32>
    %13 = vector.shape_cast %12 : vector<256xf32> to vector<1x256xf32>
    %cst_9 = arith.constant dense<0xFF800000> : vector<256xf32>
    %14 = vector.multi_reduction <maximumf>, %3, %cst_9 [0] : vector<4x256xf32> to vector<256xf32>
    %15 = vector.shape_cast %14 : vector<256xf32> to vector<1x256xf32>
    %16 = tpu.concatenate %7, %11, %13, %15 in 0 : vector<1x256xf32>, vector<1x256xf32>, vector<1x256xf32>, vector<1x256xf32> -> vector<4x256xf32>
    %c0_10 = arith.constant 0 : index
    %c0_11 = arith.constant 0 : index
    %17 = vector.load %arg3[%c0_10, %c0_11] : memref<2x256xf32, #tpu.memory_space<vmem>>, vector<1x256xf32>
    %c1 = arith.constant 1 : index
    %c0_12 = arith.constant 0 : index
    %18 = vector.load %arg3[%c1, %c0_12] : memref<2x256xf32, #tpu.memory_space<vmem>>, vector<1x256xf32>
    %c0_13 = arith.constant 0 : index
    %c0_14 = arith.constant 0 : index
    %19 = vector.load %arg1[%c0_13, %c0_14] : memref<4x49xf32, #tpu.memory_space<vmem>>, vector<4x49xf32>
    %c3_i32 = arith.constant 3 : i32
    %20 = tpu.dynamic_rotate %16 by %c3_i32 dim 1 : vector<4x256xf32>, i32 -> vector<4x256xf32>
    %cst_15 = arith.constant -3.000000e+00 : f32
    %21 = vector.broadcast %cst_15 : f32 to vector<1x256xf32>
    %22 = arith.addf %17, %21 : vector<1x256xf32>
    %cst_16 = arith.constant 0.000000e+00 : f32
    %23 = vector.broadcast %cst_16 : f32 to vector<1x256xf32>
    %24 = arith.cmpf oge, %22, %23 : vector<1x256xf32>
    %cst_17 = arith.constant 1.600000e+01 : f32
    %25 = vector.broadcast %cst_17 : f32 to vector<1x256xf32>
    %26 = arith.cmpf olt, %22, %25 : vector<1x256xf32>
    %27 = arith.andi %24, %26 : vector<1x256xi1>
    %28 = arith.extui %27 : vector<1x256xi1> to vector<1x256xi32>
    %29 = arith.sitofp %28 : vector<1x256xi32> to vector<1x256xf32>
    %30 = vector.broadcast %29 : vector<1x256xf32> to vector<4x256xf32>
    %31 = arith.mulf %20, %30 : vector<4x256xf32>
    %32 = vector.extract_strided_slice %19 {offsets = [0, 0], sizes = [4, 1], strides = [1, 1]} : vector<4x49xf32> to vector<4x1xf32>
    %33 = vector.broadcast %32 : vector<4x1xf32> to vector<4x256xf32>
    %34 = arith.mulf %31, %33 : vector<4x256xf32>
    %35 = vector.extract_strided_slice %19 {offsets = [0, 7], sizes = [4, 1], strides = [1, 1]} : vector<4x49xf32> to vector<4x1xf32>
    %36 = vector.broadcast %35 : vector<4x1xf32> to vector<4x256xf32>
    %37 = arith.mulf %31, %36 : vector<4x256xf32>
    %38 = vector.extract_strided_slice %19 {offsets = [0, 14], sizes = [4, 1], strides = [1, 1]} : vector<4x49xf32> to vector<4x1xf32>
    %39 = vector.broadcast %38 : vector<4x1xf32> to vector<4x256xf32>
    %40 = arith.mulf %31, %39 : vector<4x256xf32>
    %41 = vector.extract_strided_slice %19 {offsets = [0, 21], sizes = [4, 1], strides = [1, 1]} : vector<4x49xf32> to vector<4x1xf32>
    %42 = vector.broadcast %41 : vector<4x1xf32> to vector<4x256xf32>
    %43 = arith.mulf %31, %42 : vector<4x256xf32>
    %44 = vector.extract_strided_slice %19 {offsets = [0, 28], sizes = [4, 1], strides = [1, 1]} : vector<4x49xf32> to vector<4x1xf32>
    %45 = vector.broadcast %44 : vector<4x1xf32> to vector<4x256xf32>
    %46 = arith.mulf %31, %45 : vector<4x256xf32>
    %47 = vector.extract_strided_slice %19 {offsets = [0, 35], sizes = [4, 1], strides = [1, 1]} : vector<4x49xf32> to vector<4x1xf32>
    %48 = vector.broadcast %47 : vector<4x1xf32> to vector<4x256xf32>
    %49 = arith.mulf %31, %48 : vector<4x256xf32>
    %50 = vector.extract_strided_slice %19 {offsets = [0, 42], sizes = [4, 1], strides = [1, 1]} : vector<4x49xf32> to vector<4x1xf32>
    %51 = vector.broadcast %50 : vector<4x1xf32> to vector<4x256xf32>
    %52 = arith.mulf %31, %51 : vector<4x256xf32>
    %c2_i32 = arith.constant 2 : i32
    %53 = tpu.dynamic_rotate %16 by %c2_i32 dim 1 : vector<4x256xf32>, i32 -> vector<4x256xf32>
    %cst_18 = arith.constant -2.000000e+00 : f32
    %54 = vector.broadcast %cst_18 : f32 to vector<1x256xf32>
    %55 = arith.addf %17, %54 : vector<1x256xf32>
    %cst_19 = arith.constant 0.000000e+00 : f32
    %56 = vector.broadcast %cst_19 : f32 to vector<1x256xf32>
    %57 = arith.cmpf oge, %55, %56 : vector<1x256xf32>
    %cst_20 = arith.constant 1.600000e+01 : f32
    %58 = vector.broadcast %cst_20 : f32 to vector<1x256xf32>
    %59 = arith.cmpf olt, %55, %58 : vector<1x256xf32>
    %60 = arith.andi %57, %59 : vector<1x256xi1>
    %61 = arith.extui %60 : vector<1x256xi1> to vector<1x256xi32>
    %62 = arith.sitofp %61 : vector<1x256xi32> to vector<1x256xf32>
    %63 = vector.broadcast %62 : vector<1x256xf32> to vector<4x256xf32>
    %64 = arith.mulf %53, %63 : vector<4x256xf32>
    %65 = vector.extract_strided_slice %19 {offsets = [0, 1], sizes = [4, 1], strides = [1, 1]} : vector<4x49xf32> to vector<4x1xf32>
    %66 = vector.broadcast %65 : vector<4x1xf32> to vector<4x256xf32>
    %67 = arith.mulf %64, %66 : vector<4x256xf32>
    %68 = arith.addf %34, %67 : vector<4x256xf32>
    %69 = vector.extract_strided_slice %19 {offsets = [0, 8], sizes = [4, 1], strides = [1, 1]} : vector<4x49xf32> to vector<4x1xf32>
    %70 = vector.broadcast %69 : vector<4x1xf32> to vector<4x256xf32>
    %71 = arith.mulf %64, %70 : vector<4x256xf32>
    %72 = arith.addf %37, %71 : vector<4x256xf32>
    %73 = vector.extract_strided_slice %19 {offsets = [0, 15], sizes = [4, 1], strides = [1, 1]} : vector<4x49xf32> to vector<4x1xf32>
    %74 = vector.broadcast %73 : vector<4x1xf32> to vector<4x256xf32>
    %75 = arith.mulf %64, %74 : vector<4x256xf32>
    %76 = arith.addf %40, %75 : vector<4x256xf32>
    %77 = vector.extract_strided_slice %19 {offsets = [0, 22], sizes = [4, 1], strides = [1, 1]} : vector<4x49xf32> to vector<4x1xf32>
    %78 = vector.broadcast %77 : vector<4x1xf32> to vector<4x256xf32>
    %79 = arith.mulf %64, %78 : vector<4x256xf32>
    %80 = arith.addf %43, %79 : vector<4x256xf32>
    %81 = vector.extract_strided_slice %19 {offsets = [0, 29], sizes = [4, 1], strides = [1, 1]} : vector<4x49xf32> to vector<4x1xf32>
    %82 = vector.broadcast %81 : vector<4x1xf32> to vector<4x256xf32>
    %83 = arith.mulf %64, %82 : vector<4x256xf32>
    %84 = arith.addf %46, %83 : vector<4x256xf32>
    %85 = vector.extract_strided_slice %19 {offsets = [0, 36], sizes = [4, 1], strides = [1, 1]} : vector<4x49xf32> to vector<4x1xf32>
    %86 = vector.broadcast %85 : vector<4x1xf32> to vector<4x256xf32>
    %87 = arith.mulf %64, %86 : vector<4x256xf32>
    %88 = arith.addf %49, %87 : vector<4x256xf32>
    %89 = vector.extract_strided_slice %19 {offsets = [0, 43], sizes = [4, 1], strides = [1, 1]} : vector<4x49xf32> to vector<4x1xf32>
    %90 = vector.broadcast %89 : vector<4x1xf32> to vector<4x256xf32>
    %91 = arith.mulf %64, %90 : vector<4x256xf32>
    %92 = arith.addf %52, %91 : vector<4x256xf32>
    %c1_i32 = arith.constant 1 : i32
    %93 = tpu.dynamic_rotate %16 by %c1_i32 dim 1 : vector<4x256xf32>, i32 -> vector<4x256xf32>
    %cst_21 = arith.constant -1.000000e+00 : f32
    %94 = vector.broadcast %cst_21 : f32 to vector<1x256xf32>
    %95 = arith.addf %17, %94 : vector<1x256xf32>
    %cst_22 = arith.constant 0.000000e+00 : f32
    %96 = vector.broadcast %cst_22 : f32 to vector<1x256xf32>
    %97 = arith.cmpf oge, %95, %96 : vector<1x256xf32>
    %cst_23 = arith.constant 1.600000e+01 : f32
    %98 = vector.broadcast %cst_23 : f32 to vector<1x256xf32>
    %99 = arith.cmpf olt, %95, %98 : vector<1x256xf32>
    %100 = arith.andi %97, %99 : vector<1x256xi1>
    %101 = arith.extui %100 : vector<1x256xi1> to vector<1x256xi32>
    %102 = arith.sitofp %101 : vector<1x256xi32> to vector<1x256xf32>
    %103 = vector.broadcast %102 : vector<1x256xf32> to vector<4x256xf32>
    %104 = arith.mulf %93, %103 : vector<4x256xf32>
    %105 = vector.extract_strided_slice %19 {offsets = [0, 2], sizes = [4, 1], strides = [1, 1]} : vector<4x49xf32> to vector<4x1xf32>
    %106 = vector.broadcast %105 : vector<4x1xf32> to vector<4x256xf32>
    %107 = arith.mulf %104, %106 : vector<4x256xf32>
    %108 = arith.addf %68, %107 : vector<4x256xf32>
    %109 = vector.extract_strided_slice %19 {offsets = [0, 9], sizes = [4, 1], strides = [1, 1]} : vector<4x49xf32> to vector<4x1xf32>
    %110 = vector.broadcast %109 : vector<4x1xf32> to vector<4x256xf32>
    %111 = arith.mulf %104, %110 : vector<4x256xf32>
    %112 = arith.addf %72, %111 : vector<4x256xf32>
    %113 = vector.extract_strided_slice %19 {offsets = [0, 16], sizes = [4, 1], strides = [1, 1]} : vector<4x49xf32> to vector<4x1xf32>
    %114 = vector.broadcast %113 : vector<4x1xf32> to vector<4x256xf32>
    %115 = arith.mulf %104, %114 : vector<4x256xf32>
    %116 = arith.addf %76, %115 : vector<4x256xf32>
    %117 = vector.extract_strided_slice %19 {offsets = [0, 23], sizes = [4, 1], strides = [1, 1]} : vector<4x49xf32> to vector<4x1xf32>
    %118 = vector.broadcast %117 : vector<4x1xf32> to vector<4x256xf32>
    %119 = arith.mulf %104, %118 : vector<4x256xf32>
    %120 = arith.addf %80, %119 : vector<4x256xf32>
    %121 = vector.extract_strided_slice %19 {offsets = [0, 30], sizes = [4, 1], strides = [1, 1]} : vector<4x49xf32> to vector<4x1xf32>
    %122 = vector.broadcast %121 : vector<4x1xf32> to vector<4x256xf32>
    %123 = arith.mulf %104, %122 : vector<4x256xf32>
    %124 = arith.addf %84, %123 : vector<4x256xf32>
    %125 = vector.extract_strided_slice %19 {offsets = [0, 37], sizes = [4, 1], strides = [1, 1]} : vector<4x49xf32> to vector<4x1xf32>
    %126 = vector.broadcast %125 : vector<4x1xf32> to vector<4x256xf32>
    %127 = arith.mulf %104, %126 : vector<4x256xf32>
    %128 = arith.addf %88, %127 : vector<4x256xf32>
    %129 = vector.extract_strided_slice %19 {offsets = [0, 44], sizes = [4, 1], strides = [1, 1]} : vector<4x49xf32> to vector<4x1xf32>
    %130 = vector.broadcast %129 : vector<4x1xf32> to vector<4x256xf32>
    %131 = arith.mulf %104, %130 : vector<4x256xf32>
    %132 = arith.addf %92, %131 : vector<4x256xf32>
    %133 = vector.extract_strided_slice %19 {offsets = [0, 3], sizes = [4, 1], strides = [1, 1]} : vector<4x49xf32> to vector<4x1xf32>
    %134 = vector.broadcast %133 : vector<4x1xf32> to vector<4x256xf32>
    %135 = arith.mulf %16, %134 : vector<4x256xf32>
    %136 = arith.addf %108, %135 : vector<4x256xf32>
    %137 = vector.extract_strided_slice %19 {offsets = [0, 10], sizes = [4, 1], strides = [1, 1]} : vector<4x49xf32> to vector<4x1xf32>
    %138 = vector.broadcast %137 : vector<4x1xf32> to vector<4x256xf32>
    %139 = arith.mulf %16, %138 : vector<4x256xf32>
    %140 = arith.addf %112, %139 : vector<4x256xf32>
    %141 = vector.extract_strided_slice %19 {offsets = [0, 17], sizes = [4, 1], strides = [1, 1]} : vector<4x49xf32> to vector<4x1xf32>
    %142 = vector.broadcast %141 : vector<4x1xf32> to vector<4x256xf32>
    %143 = arith.mulf %16, %142 : vector<4x256xf32>
    %144 = arith.addf %116, %143 : vector<4x256xf32>
    %145 = vector.extract_strided_slice %19 {offsets = [0, 24], sizes = [4, 1], strides = [1, 1]} : vector<4x49xf32> to vector<4x1xf32>
    %146 = vector.broadcast %145 : vector<4x1xf32> to vector<4x256xf32>
    %147 = arith.mulf %16, %146 : vector<4x256xf32>
    %148 = arith.addf %120, %147 : vector<4x256xf32>
    %149 = vector.extract_strided_slice %19 {offsets = [0, 31], sizes = [4, 1], strides = [1, 1]} : vector<4x49xf32> to vector<4x1xf32>
    %150 = vector.broadcast %149 : vector<4x1xf32> to vector<4x256xf32>
    %151 = arith.mulf %16, %150 : vector<4x256xf32>
    %152 = arith.addf %124, %151 : vector<4x256xf32>
    %153 = vector.extract_strided_slice %19 {offsets = [0, 38], sizes = [4, 1], strides = [1, 1]} : vector<4x49xf32> to vector<4x1xf32>
    %154 = vector.broadcast %153 : vector<4x1xf32> to vector<4x256xf32>
    %155 = arith.mulf %16, %154 : vector<4x256xf32>
    %156 = arith.addf %128, %155 : vector<4x256xf32>
    %157 = vector.extract_strided_slice %19 {offsets = [0, 45], sizes = [4, 1], strides = [1, 1]} : vector<4x49xf32> to vector<4x1xf32>
    %158 = vector.broadcast %157 : vector<4x1xf32> to vector<4x256xf32>
    %159 = arith.mulf %16, %158 : vector<4x256xf32>
    %160 = arith.addf %132, %159 : vector<4x256xf32>
    %c255_i32 = arith.constant 255 : i32
    %161 = tpu.dynamic_rotate %16 by %c255_i32 dim 1 : vector<4x256xf32>, i32 -> vector<4x256xf32>
    %cst_24 = arith.constant 1.000000e+00 : f32
    %162 = vector.broadcast %cst_24 : f32 to vector<1x256xf32>
    %163 = arith.addf %17, %162 : vector<1x256xf32>
    %cst_25 = arith.constant 0.000000e+00 : f32
    %164 = vector.broadcast %cst_25 : f32 to vector<1x256xf32>
    %165 = arith.cmpf oge, %163, %164 : vector<1x256xf32>
    %cst_26 = arith.constant 1.600000e+01 : f32
    %166 = vector.broadcast %cst_26 : f32 to vector<1x256xf32>
    %167 = arith.cmpf olt, %163, %166 : vector<1x256xf32>
    %168 = arith.andi %165, %167 : vector<1x256xi1>
    %169 = arith.extui %168 : vector<1x256xi1> to vector<1x256xi32>
    %170 = arith.sitofp %169 : vector<1x256xi32> to vector<1x256xf32>
    %171 = vector.broadcast %170 : vector<1x256xf32> to vector<4x256xf32>
    %172 = arith.mulf %161, %171 : vector<4x256xf32>
    %173 = vector.extract_strided_slice %19 {offsets = [0, 4], sizes = [4, 1], strides = [1, 1]} : vector<4x49xf32> to vector<4x1xf32>
    %174 = vector.broadcast %173 : vector<4x1xf32> to vector<4x256xf32>
    %175 = arith.mulf %172, %174 : vector<4x256xf32>
    %176 = arith.addf %136, %175 : vector<4x256xf32>
    %177 = vector.extract_strided_slice %19 {offsets = [0, 11], sizes = [4, 1], strides = [1, 1]} : vector<4x49xf32> to vector<4x1xf32>
    %178 = vector.broadcast %177 : vector<4x1xf32> to vector<4x256xf32>
    %179 = arith.mulf %172, %178 : vector<4x256xf32>
    %180 = arith.addf %140, %179 : vector<4x256xf32>
    %181 = vector.extract_strided_slice %19 {offsets = [0, 18], sizes = [4, 1], strides = [1, 1]} : vector<4x49xf32> to vector<4x1xf32>
    %182 = vector.broadcast %181 : vector<4x1xf32> to vector<4x256xf32>
    %183 = arith.mulf %172, %182 : vector<4x256xf32>
    %184 = arith.addf %144, %183 : vector<4x256xf32>
    %185 = vector.extract_strided_slice %19 {offsets = [0, 25], sizes = [4, 1], strides = [1, 1]} : vector<4x49xf32> to vector<4x1xf32>
    %186 = vector.broadcast %185 : vector<4x1xf32> to vector<4x256xf32>
    %187 = arith.mulf %172, %186 : vector<4x256xf32>
    %188 = arith.addf %148, %187 : vector<4x256xf32>
    %189 = vector.extract_strided_slice %19 {offsets = [0, 32], sizes = [4, 1], strides = [1, 1]} : vector<4x49xf32> to vector<4x1xf32>
    %190 = vector.broadcast %189 : vector<4x1xf32> to vector<4x256xf32>
    %191 = arith.mulf %172, %190 : vector<4x256xf32>
    %192 = arith.addf %152, %191 : vector<4x256xf32>
    %193 = vector.extract_strided_slice %19 {offsets = [0, 39], sizes = [4, 1], strides = [1, 1]} : vector<4x49xf32> to vector<4x1xf32>
    %194 = vector.broadcast %193 : vector<4x1xf32> to vector<4x256xf32>
    %195 = arith.mulf %172, %194 : vector<4x256xf32>
    %196 = arith.addf %156, %195 : vector<4x256xf32>
    %197 = vector.extract_strided_slice %19 {offsets = [0, 46], sizes = [4, 1], strides = [1, 1]} : vector<4x49xf32> to vector<4x1xf32>
    %198 = vector.broadcast %197 : vector<4x1xf32> to vector<4x256xf32>
    %199 = arith.mulf %172, %198 : vector<4x256xf32>
    %200 = arith.addf %160, %199 : vector<4x256xf32>
    %c254_i32 = arith.constant 254 : i32
    %201 = tpu.dynamic_rotate %16 by %c254_i32 dim 1 : vector<4x256xf32>, i32 -> vector<4x256xf32>
    %cst_27 = arith.constant 2.000000e+00 : f32
    %202 = vector.broadcast %cst_27 : f32 to vector<1x256xf32>
    %203 = arith.addf %17, %202 : vector<1x256xf32>
    %cst_28 = arith.constant 0.000000e+00 : f32
    %204 = vector.broadcast %cst_28 : f32 to vector<1x256xf32>
    %205 = arith.cmpf oge, %203, %204 : vector<1x256xf32>
    %cst_29 = arith.constant 1.600000e+01 : f32
    %206 = vector.broadcast %cst_29 : f32 to vector<1x256xf32>
    %207 = arith.cmpf olt, %203, %206 : vector<1x256xf32>
    %208 = arith.andi %205, %207 : vector<1x256xi1>
    %209 = arith.extui %208 : vector<1x256xi1> to vector<1x256xi32>
    %210 = arith.sitofp %209 : vector<1x256xi32> to vector<1x256xf32>
    %211 = vector.broadcast %210 : vector<1x256xf32> to vector<4x256xf32>
    %212 = arith.mulf %201, %211 : vector<4x256xf32>
    %213 = vector.extract_strided_slice %19 {offsets = [0, 5], sizes = [4, 1], strides = [1, 1]} : vector<4x49xf32> to vector<4x1xf32>
    %214 = vector.broadcast %213 : vector<4x1xf32> to vector<4x256xf32>
    %215 = arith.mulf %212, %214 : vector<4x256xf32>
    %216 = arith.addf %176, %215 : vector<4x256xf32>
    %217 = vector.extract_strided_slice %19 {offsets = [0, 12], sizes = [4, 1], strides = [1, 1]} : vector<4x49xf32> to vector<4x1xf32>
    %218 = vector.broadcast %217 : vector<4x1xf32> to vector<4x256xf32>
    %219 = arith.mulf %212, %218 : vector<4x256xf32>
    %220 = arith.addf %180, %219 : vector<4x256xf32>
    %221 = vector.extract_strided_slice %19 {offsets = [0, 19], sizes = [4, 1], strides = [1, 1]} : vector<4x49xf32> to vector<4x1xf32>
    %222 = vector.broadcast %221 : vector<4x1xf32> to vector<4x256xf32>
    %223 = arith.mulf %212, %222 : vector<4x256xf32>
    %224 = arith.addf %184, %223 : vector<4x256xf32>
    %225 = vector.extract_strided_slice %19 {offsets = [0, 26], sizes = [4, 1], strides = [1, 1]} : vector<4x49xf32> to vector<4x1xf32>
    %226 = vector.broadcast %225 : vector<4x1xf32> to vector<4x256xf32>
    %227 = arith.mulf %212, %226 : vector<4x256xf32>
    %228 = arith.addf %188, %227 : vector<4x256xf32>
    %229 = vector.extract_strided_slice %19 {offsets = [0, 33], sizes = [4, 1], strides = [1, 1]} : vector<4x49xf32> to vector<4x1xf32>
    %230 = vector.broadcast %229 : vector<4x1xf32> to vector<4x256xf32>
    %231 = arith.mulf %212, %230 : vector<4x256xf32>
    %232 = arith.addf %192, %231 : vector<4x256xf32>
    %233 = vector.extract_strided_slice %19 {offsets = [0, 40], sizes = [4, 1], strides = [1, 1]} : vector<4x49xf32> to vector<4x1xf32>
    %234 = vector.broadcast %233 : vector<4x1xf32> to vector<4x256xf32>
    %235 = arith.mulf %212, %234 : vector<4x256xf32>
    %236 = arith.addf %196, %235 : vector<4x256xf32>
    %237 = vector.extract_strided_slice %19 {offsets = [0, 47], sizes = [4, 1], strides = [1, 1]} : vector<4x49xf32> to vector<4x1xf32>
    %238 = vector.broadcast %237 : vector<4x1xf32> to vector<4x256xf32>
    %239 = arith.mulf %212, %238 : vector<4x256xf32>
    %240 = arith.addf %200, %239 : vector<4x256xf32>
    %c253_i32 = arith.constant 253 : i32
    %241 = tpu.dynamic_rotate %16 by %c253_i32 dim 1 : vector<4x256xf32>, i32 -> vector<4x256xf32>
    %cst_30 = arith.constant 3.000000e+00 : f32
    %242 = vector.broadcast %cst_30 : f32 to vector<1x256xf32>
    %243 = arith.addf %17, %242 : vector<1x256xf32>
    %cst_31 = arith.constant 0.000000e+00 : f32
    %244 = vector.broadcast %cst_31 : f32 to vector<1x256xf32>
    %245 = arith.cmpf oge, %243, %244 : vector<1x256xf32>
    %cst_32 = arith.constant 1.600000e+01 : f32
    %246 = vector.broadcast %cst_32 : f32 to vector<1x256xf32>
    %247 = arith.cmpf olt, %243, %246 : vector<1x256xf32>
    %248 = arith.andi %245, %247 : vector<1x256xi1>
    %249 = arith.extui %248 : vector<1x256xi1> to vector<1x256xi32>
    %250 = arith.sitofp %249 : vector<1x256xi32> to vector<1x256xf32>
    %251 = vector.broadcast %250 : vector<1x256xf32> to vector<4x256xf32>
    %252 = arith.mulf %241, %251 : vector<4x256xf32>
    %253 = vector.extract_strided_slice %19 {offsets = [0, 6], sizes = [4, 1], strides = [1, 1]} : vector<4x49xf32> to vector<4x1xf32>
    %254 = vector.broadcast %253 : vector<4x1xf32> to vector<4x256xf32>
    %255 = arith.mulf %252, %254 : vector<4x256xf32>
    %256 = arith.addf %216, %255 : vector<4x256xf32>
    %257 = vector.extract_strided_slice %19 {offsets = [0, 13], sizes = [4, 1], strides = [1, 1]} : vector<4x49xf32> to vector<4x1xf32>
    %258 = vector.broadcast %257 : vector<4x1xf32> to vector<4x256xf32>
    %259 = arith.mulf %252, %258 : vector<4x256xf32>
    %260 = arith.addf %220, %259 : vector<4x256xf32>
    %261 = vector.extract_strided_slice %19 {offsets = [0, 20], sizes = [4, 1], strides = [1, 1]} : vector<4x49xf32> to vector<4x1xf32>
    %262 = vector.broadcast %261 : vector<4x1xf32> to vector<4x256xf32>
    %263 = arith.mulf %252, %262 : vector<4x256xf32>
    %264 = arith.addf %224, %263 : vector<4x256xf32>
    %265 = vector.extract_strided_slice %19 {offsets = [0, 27], sizes = [4, 1], strides = [1, 1]} : vector<4x49xf32> to vector<4x1xf32>
    %266 = vector.broadcast %265 : vector<4x1xf32> to vector<4x256xf32>
    %267 = arith.mulf %252, %266 : vector<4x256xf32>
    %268 = arith.addf %228, %267 : vector<4x256xf32>
    %269 = vector.extract_strided_slice %19 {offsets = [0, 34], sizes = [4, 1], strides = [1, 1]} : vector<4x49xf32> to vector<4x1xf32>
    %270 = vector.broadcast %269 : vector<4x1xf32> to vector<4x256xf32>
    %271 = arith.mulf %252, %270 : vector<4x256xf32>
    %272 = arith.addf %232, %271 : vector<4x256xf32>
    %273 = vector.extract_strided_slice %19 {offsets = [0, 41], sizes = [4, 1], strides = [1, 1]} : vector<4x49xf32> to vector<4x1xf32>
    %274 = vector.broadcast %273 : vector<4x1xf32> to vector<4x256xf32>
    %275 = arith.mulf %252, %274 : vector<4x256xf32>
    %276 = arith.addf %236, %275 : vector<4x256xf32>
    %277 = vector.extract_strided_slice %19 {offsets = [0, 48], sizes = [4, 1], strides = [1, 1]} : vector<4x49xf32> to vector<4x1xf32>
    %278 = vector.broadcast %277 : vector<4x1xf32> to vector<4x256xf32>
    %279 = arith.mulf %252, %278 : vector<4x256xf32>
    %280 = arith.addf %240, %279 : vector<4x256xf32>
    %281 = vector.extract_strided_slice %256 {offsets = [0, 0], sizes = [2, 256], strides = [1, 1]} : vector<4x256xf32> to vector<2x256xf32>
    %282 = vector.extract_strided_slice %256 {offsets = [2, 0], sizes = [2, 256], strides = [1, 1]} : vector<4x256xf32> to vector<2x256xf32>
    %283 = arith.addf %281, %282 : vector<2x256xf32>
    %c48_i32 = arith.constant 48 : i32
    %284 = tpu.dynamic_rotate %283 by %c48_i32 dim 1 : vector<2x256xf32>, i32 -> vector<2x256xf32>
    %cst_33 = arith.constant -3.000000e+00 : f32
    %285 = vector.broadcast %cst_33 : f32 to vector<1x256xf32>
    %286 = arith.addf %18, %285 : vector<1x256xf32>
    %cst_34 = arith.constant 0.000000e+00 : f32
    %287 = vector.broadcast %cst_34 : f32 to vector<1x256xf32>
    %288 = arith.cmpf oge, %286, %287 : vector<1x256xf32>
    %cst_35 = arith.constant 1.600000e+01 : f32
    %289 = vector.broadcast %cst_35 : f32 to vector<1x256xf32>
    %290 = arith.cmpf olt, %286, %289 : vector<1x256xf32>
    %291 = arith.andi %288, %290 : vector<1x256xi1>
    %292 = arith.extui %291 : vector<1x256xi1> to vector<1x256xi32>
    %293 = arith.sitofp %292 : vector<1x256xi32> to vector<1x256xf32>
    %294 = vector.broadcast %293 : vector<1x256xf32> to vector<2x256xf32>
    %295 = arith.mulf %284, %294 : vector<2x256xf32>
    %296 = vector.extract_strided_slice %260 {offsets = [0, 0], sizes = [2, 256], strides = [1, 1]} : vector<4x256xf32> to vector<2x256xf32>
    %297 = vector.extract_strided_slice %260 {offsets = [2, 0], sizes = [2, 256], strides = [1, 1]} : vector<4x256xf32> to vector<2x256xf32>
    %298 = arith.addf %296, %297 : vector<2x256xf32>
    %c32_i32 = arith.constant 32 : i32
    %299 = tpu.dynamic_rotate %298 by %c32_i32 dim 1 : vector<2x256xf32>, i32 -> vector<2x256xf32>
    %cst_36 = arith.constant -2.000000e+00 : f32
    %300 = vector.broadcast %cst_36 : f32 to vector<1x256xf32>
    %301 = arith.addf %18, %300 : vector<1x256xf32>
    %cst_37 = arith.constant 0.000000e+00 : f32
    %302 = vector.broadcast %cst_37 : f32 to vector<1x256xf32>
    %303 = arith.cmpf oge, %301, %302 : vector<1x256xf32>
    %cst_38 = arith.constant 1.600000e+01 : f32
    %304 = vector.broadcast %cst_38 : f32 to vector<1x256xf32>
    %305 = arith.cmpf olt, %301, %304 : vector<1x256xf32>
    %306 = arith.andi %303, %305 : vector<1x256xi1>
    %307 = arith.extui %306 : vector<1x256xi1> to vector<1x256xi32>
    %308 = arith.sitofp %307 : vector<1x256xi32> to vector<1x256xf32>
    %309 = vector.broadcast %308 : vector<1x256xf32> to vector<2x256xf32>
    %310 = arith.mulf %299, %309 : vector<2x256xf32>
    %311 = arith.addf %295, %310 : vector<2x256xf32>
    %312 = vector.extract_strided_slice %264 {offsets = [0, 0], sizes = [2, 256], strides = [1, 1]} : vector<4x256xf32> to vector<2x256xf32>
    %313 = vector.extract_strided_slice %264 {offsets = [2, 0], sizes = [2, 256], strides = [1, 1]} : vector<4x256xf32> to vector<2x256xf32>
    %314 = arith.addf %312, %313 : vector<2x256xf32>
    %c16_i32 = arith.constant 16 : i32
    %315 = tpu.dynamic_rotate %314 by %c16_i32 dim 1 : vector<2x256xf32>, i32 -> vector<2x256xf32>
    %cst_39 = arith.constant -1.000000e+00 : f32
    %316 = vector.broadcast %cst_39 : f32 to vector<1x256xf32>
    %317 = arith.addf %18, %316 : vector<1x256xf32>
    %cst_40 = arith.constant 0.000000e+00 : f32
    %318 = vector.broadcast %cst_40 : f32 to vector<1x256xf32>
    %319 = arith.cmpf oge, %317, %318 : vector<1x256xf32>
    %cst_41 = arith.constant 1.600000e+01 : f32
    %320 = vector.broadcast %cst_41 : f32 to vector<1x256xf32>
    %321 = arith.cmpf olt, %317, %320 : vector<1x256xf32>
    %322 = arith.andi %319, %321 : vector<1x256xi1>
    %323 = arith.extui %322 : vector<1x256xi1> to vector<1x256xi32>
    %324 = arith.sitofp %323 : vector<1x256xi32> to vector<1x256xf32>
    %325 = vector.broadcast %324 : vector<1x256xf32> to vector<2x256xf32>
    %326 = arith.mulf %315, %325 : vector<2x256xf32>
    %327 = arith.addf %311, %326 : vector<2x256xf32>
    %328 = vector.extract_strided_slice %268 {offsets = [0, 0], sizes = [2, 256], strides = [1, 1]} : vector<4x256xf32> to vector<2x256xf32>
    %329 = vector.extract_strided_slice %268 {offsets = [2, 0], sizes = [2, 256], strides = [1, 1]} : vector<4x256xf32> to vector<2x256xf32>
    %330 = arith.addf %328, %329 : vector<2x256xf32>
    %331 = arith.addf %327, %330 : vector<2x256xf32>
    %332 = vector.extract_strided_slice %272 {offsets = [0, 0], sizes = [2, 256], strides = [1, 1]} : vector<4x256xf32> to vector<2x256xf32>
    %333 = vector.extract_strided_slice %272 {offsets = [2, 0], sizes = [2, 256], strides = [1, 1]} : vector<4x256xf32> to vector<2x256xf32>
    %334 = arith.addf %332, %333 : vector<2x256xf32>
    %c240_i32 = arith.constant 240 : i32
    %335 = tpu.dynamic_rotate %334 by %c240_i32 dim 1 : vector<2x256xf32>, i32 -> vector<2x256xf32>
    %cst_42 = arith.constant 1.000000e+00 : f32
    %336 = vector.broadcast %cst_42 : f32 to vector<1x256xf32>
    %337 = arith.addf %18, %336 : vector<1x256xf32>
    %cst_43 = arith.constant 0.000000e+00 : f32
    %338 = vector.broadcast %cst_43 : f32 to vector<1x256xf32>
    %339 = arith.cmpf oge, %337, %338 : vector<1x256xf32>
    %cst_44 = arith.constant 1.600000e+01 : f32
    %340 = vector.broadcast %cst_44 : f32 to vector<1x256xf32>
    %341 = arith.cmpf olt, %337, %340 : vector<1x256xf32>
    %342 = arith.andi %339, %341 : vector<1x256xi1>
    %343 = arith.extui %342 : vector<1x256xi1> to vector<1x256xi32>
    %344 = arith.sitofp %343 : vector<1x256xi32> to vector<1x256xf32>
    %345 = vector.broadcast %344 : vector<1x256xf32> to vector<2x256xf32>
    %346 = arith.mulf %335, %345 : vector<2x256xf32>
    %347 = arith.addf %331, %346 : vector<2x256xf32>
    %348 = vector.extract_strided_slice %276 {offsets = [0, 0], sizes = [2, 256], strides = [1, 1]} : vector<4x256xf32> to vector<2x256xf32>
    %349 = vector.extract_strided_slice %276 {offsets = [2, 0], sizes = [2, 256], strides = [1, 1]} : vector<4x256xf32> to vector<2x256xf32>
    %350 = arith.addf %348, %349 : vector<2x256xf32>
    %c224_i32 = arith.constant 224 : i32
    %351 = tpu.dynamic_rotate %350 by %c224_i32 dim 1 : vector<2x256xf32>, i32 -> vector<2x256xf32>
    %cst_45 = arith.constant 2.000000e+00 : f32
    %352 = vector.broadcast %cst_45 : f32 to vector<1x256xf32>
    %353 = arith.addf %18, %352 : vector<1x256xf32>
    %cst_46 = arith.constant 0.000000e+00 : f32
    %354 = vector.broadcast %cst_46 : f32 to vector<1x256xf32>
    %355 = arith.cmpf oge, %353, %354 : vector<1x256xf32>
    %cst_47 = arith.constant 1.600000e+01 : f32
    %356 = vector.broadcast %cst_47 : f32 to vector<1x256xf32>
    %357 = arith.cmpf olt, %353, %356 : vector<1x256xf32>
    %358 = arith.andi %355, %357 : vector<1x256xi1>
    %359 = arith.extui %358 : vector<1x256xi1> to vector<1x256xi32>
    %360 = arith.sitofp %359 : vector<1x256xi32> to vector<1x256xf32>
    %361 = vector.broadcast %360 : vector<1x256xf32> to vector<2x256xf32>
    %362 = arith.mulf %351, %361 : vector<2x256xf32>
    %363 = arith.addf %347, %362 : vector<2x256xf32>
    %364 = vector.extract_strided_slice %280 {offsets = [0, 0], sizes = [2, 256], strides = [1, 1]} : vector<4x256xf32> to vector<2x256xf32>
    %365 = vector.extract_strided_slice %280 {offsets = [2, 0], sizes = [2, 256], strides = [1, 1]} : vector<4x256xf32> to vector<2x256xf32>
    %366 = arith.addf %364, %365 : vector<2x256xf32>
    %c208_i32 = arith.constant 208 : i32
    %367 = tpu.dynamic_rotate %366 by %c208_i32 dim 1 : vector<2x256xf32>, i32 -> vector<2x256xf32>
    %cst_48 = arith.constant 3.000000e+00 : f32
    %368 = vector.broadcast %cst_48 : f32 to vector<1x256xf32>
    %369 = arith.addf %18, %368 : vector<1x256xf32>
    %cst_49 = arith.constant 0.000000e+00 : f32
    %370 = vector.broadcast %cst_49 : f32 to vector<1x256xf32>
    %371 = arith.cmpf oge, %369, %370 : vector<1x256xf32>
    %cst_50 = arith.constant 1.600000e+01 : f32
    %372 = vector.broadcast %cst_50 : f32 to vector<1x256xf32>
    %373 = arith.cmpf olt, %369, %372 : vector<1x256xf32>
    %374 = arith.andi %371, %373 : vector<1x256xi1>
    %375 = arith.extui %374 : vector<1x256xi1> to vector<1x256xi32>
    %376 = arith.sitofp %375 : vector<1x256xi32> to vector<1x256xf32>
    %377 = vector.broadcast %376 : vector<1x256xf32> to vector<2x256xf32>
    %378 = arith.mulf %367, %377 : vector<2x256xf32>
    %379 = arith.addf %363, %378 : vector<2x256xf32>
    %380 = vector.extract_strided_slice %379 {offsets = [0, 0], sizes = [1, 256], strides = [1, 1]} : vector<2x256xf32> to vector<1x256xf32>
    %c0_51 = arith.constant 0 : index
    %381 = memref.load %arg2[%c0_51] : memref<2xf32, #tpu.memory_space<smem>>
    %382 = vector.broadcast %381 : f32 to vector<1x256xf32>
    %383 = arith.addf %380, %382 : vector<1x256xf32>
    %384 = arith.negf %383 : vector<1x256xf32>
    %385 = math.exp %384 : vector<1x256xf32>
    %cst_52 = arith.constant 1.000000e+00 : f32
    %386 = vector.broadcast %cst_52 : f32 to vector<1x256xf32>
    %387 = arith.addf %386, %385 : vector<1x256xf32>
    %388 = arith.divf %386, %387 : vector<1x256xf32>
    %389 = vector.extract_strided_slice %379 {offsets = [1, 0], sizes = [1, 256], strides = [1, 1]} : vector<2x256xf32> to vector<1x256xf32>
    %c1_53 = arith.constant 1 : index
    %390 = memref.load %arg2[%c1_53] : memref<2xf32, #tpu.memory_space<smem>>
    %391 = vector.broadcast %390 : f32 to vector<1x256xf32>
    %392 = arith.addf %389, %391 : vector<1x256xf32>
    %393 = arith.negf %392 : vector<1x256xf32>
    %394 = math.exp %393 : vector<1x256xf32>
    %cst_54 = arith.constant 1.000000e+00 : f32
    %395 = vector.broadcast %cst_54 : f32 to vector<1x256xf32>
    %396 = arith.addf %395, %394 : vector<1x256xf32>
    %397 = arith.divf %395, %396 : vector<1x256xf32>
    %398 = vector.broadcast %388 : vector<1x256xf32> to vector<4x256xf32>
    %399 = arith.mulf %1, %398 : vector<4x256xf32>
    %400 = vector.broadcast %397 : vector<1x256xf32> to vector<4x256xf32>
    %401 = arith.mulf %3, %400 : vector<4x256xf32>
    %402 = arith.addf %399, %401 : vector<4x256xf32>
    %c0_55 = arith.constant 0 : index
    %c0_56 = arith.constant 0 : index
    %c0_57 = arith.constant 0 : index
    %403 = vector.load %arg6[%c0_55, %c0_56, %c0_57] : memref<1x4x256xf32, #tpu.memory_space<vmem>>, vector<1x4x256xf32>
    %404 = vector.shape_cast %403 : vector<1x4x256xf32> to vector<4x256xf32>
    %405 = vector.shape_cast %402 : vector<4x256xf32> to vector<1x4x256xf32>
    tpu.vector_store %arg6[%c0_55, %c0_56, %c0_57], %405 {strides = array<i32>} : memref<1x4x256xf32, #tpu.memory_space<vmem>>, vector<1x4x256xf32>,
    return
  }
  func.func @transform_0(%arg0: i32) -> (i32, i32) {
    %c0_i32 = arith.constant 0 : i32
    %c0_i32_0 = arith.constant 0 : i32
    %c0_i32_1 = arith.constant 0 : i32
    return %c0_i32, %c0_i32_0 : i32, i32
  }
  func.func @transform_1(%arg0: i32) -> i32 {
    %c0_i32 = arith.constant 0 : i32
    %c0_i32_0 = arith.constant 0 : i32
    return %c0_i32 : i32
  }
  func.func @transform_2(%arg0: i32) -> (i32, i32) {
    %c0_i32 = arith.constant 0 : i32
    %c0_i32_0 = arith.constant 0 : i32
    %c0_i32_1 = arith.constant 0 : i32
    return %c0_i32, %c0_i32_0 : i32, i32
  }
  func.func @transform_3(%arg0: i32) -> (i32, i32, i32) {
    %c0_i32 = arith.constant 0 : i32
    %c0_i32_0 = arith.constant 0 : i32
    %c0_i32_1 = arith.constant 0 : i32
    return %arg0, %c0_i32, %c0_i32_0 : i32, i32, i32
  }
  func.func @transform_4(%arg0: i32) -> (i32, i32, i32) {
    %c0_i32 = arith.constant 0 : i32
    %c0_i32_0 = arith.constant 0 : i32
    %c0_i32_1 = arith.constant 0 : i32
    return %arg0, %c0_i32, %c0_i32_0 : i32, i32, i32
  }
  func.func @transform_5(%arg0: i32) -> (i32, i32, i32) {
    %c0_i32 = arith.constant 0 : i32
    %c0_i32_0 = arith.constant 0 : i32
    %c0_i32_1 = arith.constant 0 : i32
    return %arg0, %c0_i32, %c0_i32_0 : i32, i32, i32
  }
}

</mosaic_0001>

<llo_original>
// kernel: ssa_pallas.1
$region0: #{ssa_pallas.1}
  #allocation0 [shape = 'u32[]', space=smem, size = 0x4, offset = 0x4, fixed_abs, tag = 'smem constant byte address 0x4 - core index']
  #allocation1 [shape = 'u32[72,128]{1,0:T(1,128)}', space=vmem, size = 0x9000, scoped, tag = 'internal scratch']
  %s0 = inlined_call_operand.vmem [shape: f32[4,49], index: 0, kind: input, shape index: {}]
  %s1 = inlined_call_operand.vmem [shape: f32[2], index: 1, kind: input, shape index: {}]
  %s2 = inlined_call_operand.vmem [shape: f32[2,256], index: 2, kind: input, shape index: {}]
  %s3 = inlined_call_operand.vmem [shape: f32[2,4,256], index: 3, kind: input, shape index: {}]
  %s4 = inlined_call_operand.vmem [shape: f32[2,4,256], index: 4, kind: input, shape index: {}]
  %s5 = inlined_call_operand.vmem [shape: f32[2,4,256], index: 5, kind: output, shape index: {}]
  %s6 = sld [smem:[#allocation0]]
  $region57: #{ssa_pallas.1} parent=0
    _
  %s8 = ssub.s32 1, %s6
  %s9 = scalar_select 0, %s8, %s6
  $region1: #{ssa_pallas.1} parent=0
    #allocation2 [shape = 'u8[512]{0}', space=smem, size = 0x200, scoped, tag = 'input window, operand 1, single buffered']
    #allocation3 [shape = 's32[2]{0}', space=sflag, size = 0x8, scoped, tag = 'scoped memory for ssa_pallas.1']
    %10 = vsyncpa [#allocation3], 0
    loop: start=0, step=1, limit=4
    $region2: #{ssa_pallas.1} parent=1 // loop_pre_header
      _
    $region3: #{ssa_pallas.1} parent=1 // loop_header
      %s12 = sphi 0, %s16
      %p13 = scmp.ge.s32.totalorder %s12, 4
      %s20 = sphi 0, %s20
      %s22 = sphi 0, %s20
      %s23 = sphi 0, %s22
      %s37 = sphi 0, %s23
      %s41 = sphi 0, %s41
      %s43 = sphi 0, %s41
      %s44 = sphi 0, %s43
      %s58 = sphi 0, %s44
      %s62 = sphi 0, %s62
      %s64 = sphi 0, %s62
      %s65 = sphi 0, %s64
      %s79 = sphi 0, %s65
      %s85 = sphi 0, %s87
      %s88 = sphi 0, %s85
      %s89 = sphi 0, %s88
      %s105 = sphi 0, %s89
      %s111 = sphi 0, %s113
      %s114 = sphi 0, %s111
      %s115 = sphi 0, %s114
      %s131 = sphi 0, %s115
      %s137 = sphi 0, %s139
      %s140 = sphi 0, %s137
      %s141 = sphi 0, %s140
      %s157 = sphi 0, %s141
    $region4: #{ssa_pallas.1} parent=1 // loop_header_branch
      %15 = sbr.rel (%p13) target = $region8
    $region5: #{ssa_pallas.1} parent=1 // loop_body
      %s17 = ssub.s32 %s12, 1
      %s18 = ssub.s32 %s12, 2
      %s19 = sadd.s32 %s12, 1
      %s21 = sadd.s32 %s20, 1
      %p24 = scmp.eq.s32.totalorder %s12, 1
      %p25 = scmp.ne.s32.totalorder %s20, %s22
      %p26 = scmp.eq.s32.totalorder %s12, 0
      %p27 = por %p25, %p26
      %p28 = scmp.ne.s32.totalorder %s20, %s22
      %p29 = scmp.eq.s32.totalorder %s17, 1
      %p30 = por %p28, %p29
      %p31 = scmp.ne.s32.totalorder %s22, %s23
      %p32 = scmp.eq.s32.totalorder %s17, 0
      %p33 = por %p31, %p32
      %p34 = scmp.ne.s32.totalorder %s22, %s23
      %p35 = scmp.eq.s32.totalorder %s18, 1
      %p36 = por %p34, %p35
      %p38 = scmp.ne.s32.totalorder %s23, %s37
      %p39 = scmp.eq.s32.totalorder %s18, 0
      %p40 = por %p38, %p39
      %s42 = sadd.s32 %s41, 1
      %p45 = scmp.eq.s32.totalorder %s12, 1
      %p46 = scmp.ne.s32.totalorder %s41, %s43
      %p47 = scmp.eq.s32.totalorder %s12, 0
      %p48 = por %p46, %p47
      %p49 = scmp.ne.s32.totalorder %s41, %s43
      %p50 = scmp.eq.s32.totalorder %s17, 1
      %p51 = por %p49, %p50
      %p52 = scmp.ne.s32.totalorder %s43, %s44
      %p53 = scmp.eq.s32.totalorder %s17, 0
      %p54 = por %p52, %p53
      %p55 = scmp.ne.s32.totalorder %s43, %s44
      %p56 = scmp.eq.s32.totalorder %s18, 1
      %p57 = por %p55, %p56
      %p59 = scmp.ne.s32.totalorder %s44, %s58
      %p60 = scmp.eq.s32.totalorder %s18, 0
      %p61 = por %p59, %p60
      %s63 = sadd.s32 %s62, 1
      %p66 = scmp.eq.s32.totalorder %s12, 1
      %p67 = scmp.ne.s32.totalorder %s62, %s64
      %p68 = scmp.eq.s32.totalorder %s12, 0
      %p69 = por %p67, %p68
      %p70 = scmp.ne.s32.totalorder %s62, %s64
      %p71 = scmp.eq.s32.totalorder %s17, 1
      %p72 = por %p70, %p71
      %p73 = scmp.ne.s32.totalorder %s64, %s65
      %p74 = scmp.eq.s32.totalorder %s17, 0
      %p75 = por %p73, %p74
      %p76 = scmp.ne.s32.totalorder %s64, %s65
      %p77 = scmp.eq.s32.totalorder %s18, 1
      %p78 = por %p76, %p77
      %p80 = scmp.ne.s32.totalorder %s65, %s79
      %p81 = scmp.eq.s32.totalorder %s18, 0
      %p82 = por %p80, %p81
      %s83 = ssub.s32 %s12, %s19
      %p84 = scmp.eq.s32.totalorder %s83, 0
      %s86 = sadd.s32 %s85, 1
      %s87 = scalar_select %p84, %s85, %s86
      %p90 = pneg %p84
      %p91 = scmp.eq.s32.totalorder %s12, 1
      %p92 = por %p90, %p91
      %p93 = scmp.ne.s32.totalorder %s85, %s88
      %p94 = scmp.eq.s32.totalorder %s12, 0
      %p95 = por %p93, %p94
      %p96 = scmp.ne.s32.totalorder %s85, %s88
      %p97 = scmp.eq.s32.totalorder %s17, 1
      %p98 = por %p96, %p97
      %p99 = scmp.ne.s32.totalorder %s88, %s89
      %p100 = scmp.eq.s32.totalorder %s17, 0
      %p101 = por %p99, %p100
      %p102 = scmp.ne.s32.totalorder %s88, %s89
      %p103 = scmp.eq.s32.totalorder %s18, 1
      %p104 = por %p102, %p103
      %p106 = scmp.ne.s32.totalorder %s89, %s105
      %p107 = scmp.eq.s32.totalorder %s18, 0
      %p108 = por %p106, %p107
      %s109 = ssub.s32 %s12, %s19
      %p110 = scmp.eq.s32.totalorder %s109, 0
      %s112 = sadd.s32 %s111, 1
      %s113 = scalar_select %p110, %s111, %s112
      %p116 = pneg %p110
      %p117 = scmp.eq.s32.totalorder %s12, 1
      %p118 = por %p116, %p117
      %p119 = scmp.ne.s32.totalorder %s111, %s114
      %p120 = scmp.eq.s32.totalorder %s12, 0
      %p121 = por %p119, %p120
      %p122 = scmp.ne.s32.totalorder %s111, %s114
      %p123 = scmp.eq.s32.totalorder %s17, 1
      %p124 = por %p122, %p123
      %p125 = scmp.ne.s32.totalorder %s114, %s115
      %p126 = scmp.eq.s32.totalorder %s17, 0
      %p127 = por %p125, %p126
      %p128 = scmp.ne.s32.totalorder %s114, %s115
      %p129 = scmp.eq.s32.totalorder %s18, 1
      %p130 = por %p128, %p129
      %p132 = scmp.ne.s32.totalorder %s115, %s131
      %p133 = scmp.eq.s32.totalorder %s18, 0
      %p134 = por %p132, %p133
      %s135 = ssub.s32 %s12, %s19
      %p136 = scmp.eq.s32.totalorder %s135, 0
      %s138 = sadd.s32 %s137, 1
      %s139 = scalar_select %p136, %s137, %s138
      %p142 = pneg %p136
      %p143 = scmp.eq.s32.totalorder %s12, 1
      %p144 = por %p142, %p143
      %p145 = scmp.ne.s32.totalorder %s137, %s140
      %p146 = scmp.eq.s32.totalorder %s12, 0
      %p147 = por %p145, %p146
      %p148 = scmp.ne.s32.totalorder %s137, %s140
      %p149 = scmp.eq.s32.totalorder %s17, 1
      %p150 = por %p148, %p149
      %p151 = scmp.ne.s32.totalorder %s140, %s141
      %p152 = scmp.eq.s32.totalorder %s17, 0
      %p153 = por %p151, %p152
      %p154 = scmp.ne.s32.totalorder %s140, %s141
      %p155 = scmp.eq.s32.totalorder %s18, 1
      %p156 = por %p154, %p155
      %p158 = scmp.ne.s32.totalorder %s141, %s157
      %p159 = scmp.eq.s32.totalorder %s18, 0
      %p160 = por %p158, %p159
      %p161 = scmp.le.s32.totalorder 1, %s12
      %p162 = scmp.lt.s32.totalorder %s12, 3
      %p163 = pnand %p161, %p162
      %p164 = pneg %p163
      // Predicated region
      $region9: #{ssa_pallas.1} parent=5 // pred_check
        _
      $region10: #{ssa_pallas.1} parent=5 // pred_check_branch
        %166 = sbr.rel (%p163) target = $region12
      $region11: #{ssa_pallas.1} parent=5 // pred_region
        %s167 = ssub.s32 %s12, 1
        // Predicated region
        $region13: #{ssa_pallas.1} parent=11 // pred_check
          %p168 = pneg %p33
        $region14: #{ssa_pallas.1} parent=11 // pred_check_branch
          %170 = sbr.rel (%p168) target = $region16
        $region15: #{ssa_pallas.1} parent=11 // pred_region
          _
        $region16: #{ssa_pallas.1} parent=11 // pred_fallthru
          _
        // Predicated region
        $region17: #{ssa_pallas.1} parent=11 // pred_check
          %p171 = pneg %p54
        $region18: #{ssa_pallas.1} parent=11 // pred_check_branch
          %173 = sbr.rel (%p171) target = $region20
        $region19: #{ssa_pallas.1} parent=11 // pred_region
          %175 = vsyncadd [#allocation3], 0
          %s177 = sshll.u32 %s1, 4
          %s178 = int_to_ptr.vmem [resolvable:$true] %s177
          %180 = dma.vmem_to_smem %s178, 16, [#allocation2], [#allocation3]
        $region20: #{ssa_pallas.1} parent=11 // pred_fallthru
          _
        // Predicated region
        $region21: #{ssa_pallas.1} parent=11 // pred_check
          %p181 = pneg %p75
        $region22: #{ssa_pallas.1} parent=11 // pred_check_branch
          %183 = sbr.rel (%p181) target = $region24
        $region23: #{ssa_pallas.1} parent=11 // pred_region
          _
        $region24: #{ssa_pallas.1} parent=11 // pred_fallthru
          _
      $region12: #{ssa_pallas.1} parent=5 // pred_fallthru
        _
      %p184 = scmp.lt.s32.totalorder %s12, 2
      // Predicated region
      $region25: #{ssa_pallas.1} parent=5 // pred_check
        %p185 = pneg %p184
      $region26: #{ssa_pallas.1} parent=5 // pred_check_branch
        %187 = sbr.rel (%p185) target = $region28
      $region27: #{ssa_pallas.1} parent=5 // pred_region
        // Predicated region
        $region29: #{ssa_pallas.1} parent=27 // pred_check
          %p188 = pneg %p95
        $region30: #{ssa_pallas.1} parent=27 // pred_check_branch
          %190 = sbr.rel (%p188) target = $region32
        $region31: #{ssa_pallas.1} parent=27 // pred_region
          %p191 = scmp.lt.s32.totalorder %s12, 1
          %s192 = scalar_select %p191, %s12, 1
          %s193 = smul.addr %s192, 2
          %s194 = smul.addr %s193, 4
          %s195 = scalar_lea.vmem %s3, %s194
        $region32: #{ssa_pallas.1} parent=27 // pred_fallthru
          _
        // Predicated region
        $region33: #{ssa_pallas.1} parent=27 // pred_check
          %p196 = pneg %p121
        $region34: #{ssa_pallas.1} parent=27 // pred_check_branch
          %198 = sbr.rel (%p196) target = $region36
        $region35: #{ssa_pallas.1} parent=27 // pred_region
          %p199 = scmp.lt.s32.totalorder %s12, 1
          %s200 = scalar_select %p199, %s12, 1
          %s201 = smul.addr %s200, 2
          %s202 = smul.addr %s201, 4
          %s203 = scalar_lea.vmem %s4, %s202
        $region36: #{ssa_pallas.1} parent=27 // pred_fallthru
          _
      $region28: #{ssa_pallas.1} parent=5 // pred_fallthru
        _
      %p204 = scmp.le.s32.totalorder 1, %s12
      %p205 = scmp.lt.s32.totalorder %s12, 3
      %p206 = pnand %p204, %p205
      %p207 = pneg %p206
      // Predicated region
      $region37: #{ssa_pallas.1} parent=5 // pred_check
        _
      $region38: #{ssa_pallas.1} parent=5 // pred_check_branch
        %209 = sbr.rel (%p206) target = $region40
      $region39: #{ssa_pallas.1} parent=5 // pred_region
        %s210 = ssub.s32 %s12, 1
        // Predicated region
        $region41: #{ssa_pallas.1} parent=39 // pred_check
          %p211 = pneg %p54
        $region42: #{ssa_pallas.1} parent=39 // pred_check_branch
          %213 = sbr.rel (%p211) target = $region44
        $region43: #{ssa_pallas.1} parent=39 // pred_region
          %215 = dma.done [#allocation3], 16
        $region44: #{ssa_pallas.1} parent=39 // pred_fallthru
          _
        %216 = sfence
        %p217 = pneg %p33
        %p218 = pneg %p30
        %p219 = pneg %p54
        %p220 = pneg %p51
        %p221 = pneg %p75
        %p222 = pneg %p72
        %p223 = scmp.lt.s32.totalorder %s17, 1
        %s224 = scalar_select %p223, %s17, 1
        %s225 = smul.addr %s224, 2
        %s226 = smul.addr %s225, 4
        %s227 = scalar_lea.vmem %s3, %s226
        %p228 = pneg %p101
        %p229 = pneg %p98
        %p230 = scmp.lt.s32.totalorder %s17, 1
        %s231 = scalar_select %p230, %s17, 1
        %s232 = smul.addr %s231, 2
        %s233 = smul.addr %s232, 4
        %s234 = scalar_lea.vmem %s4, %s233
        %p235 = pneg %p127
        %p236 = pneg %p124
        %p237 = pneg %p153
        %p238 = pneg %p150
        %p239 = scmp.lt.s32.totalorder %s17, 1
        %s240 = scalar_select %p239, %s17, 1
        %s241 = smul.addr %s240, 2
        %s242 = smul.addr %s241, 4
        %s243 = scalar_lea.vmem %s5, %s242
        %p244 = scmp.lt.s32.totalorder %s17, 1
        %s245 = scalar_select %p244, %s17, 1
        %s246 = smul.addr %s245, 2
        %s247 = smul.addr %s246, 4
        %s248 = scalar_lea.vmem %s3, %s247
        %p249 = scmp.lt.s32.totalorder %s17, 1
        %s250 = scalar_select %p249, %s17, 1
        %s251 = smul.addr %s250, 2
        %s252 = smul.addr %s251, 4
        %s253 = scalar_lea.vmem %s4, %s252
        %p254 = scmp.lt.s32.totalorder %s17, 1
        %s255 = scalar_select %p254, %s17, 1
        %s256 = smul.addr %s255, 2
        %s257 = smul.addr %s256, 4
        %s258 = scalar_lea.vmem %s5, %s257
        %v259 = vld [vmem:[%s248] sm:$0xff]
        %v260 = vld [vmem:[%s253] sm:$0xff]
        %262 = vst [vmem:[#allocation1] ss:$2 sm:$0xff] %v259
        %v263 = vld.sshfl [vmem:[#allocation1] sm:$0xff pattern:$0x75316420]
        %v264 = vld.sshfl [vmem:[#allocation1 + $0x8] sm:$0xff pattern:$0x75316420]
        %vm267 = vcmask 1043456
        %v268 = vsel %vm267, %v263, 0.0
        %v269 = vrot.slane %v268, 4
        %v270 = vadd.f32 %v268, %v269
        %v271 = vrot.slane %v270, 2
        %v272 = vadd.f32 %v270, %v271
        %v273 = vrot.slane %v272, 1
        %v274 = vadd.f32 %v272, %v273
        %v275 = vsel %vm267, %v264, 0.0
        %v276 = vrot.slane %v275, 4
        %v277 = vadd.f32 %v275, %v276
        %v278 = vrot.slane %v277, 2
        %v279 = vadd.f32 %v277, %v278
        %v280 = vrot.slane %v279, 1
        %v281 = vadd.f32 %v279, %v280
        %v282 = vrcp.pop 4.0
        %v283 = vmul.f32 4.0, %v282
        %v284 = vsub.f32 1.0, %v283
        %v285 = vmul.f32 %v282, %v284
        %v286 = vadd.f32 %v282, %v285
        %vm287 = vweird.f32 %v282
        %v288 = vsel %vm287, %v282, %v286
        %v289 = vmul.f32 %v274, %v288
        %v290 = vmul.f32 %v281, %v288
        %292 = vst [vmem:[#allocation1] ss:$2 sm:$0xff] %v260
        %v293 = vld.sshfl [vmem:[#allocation1] sm:$0xff pattern:$0x75316420]
        %v294 = vld.sshfl [vmem:[#allocation1 + $0x8] sm:$0xff pattern:$0x75316420]
        %v297 = vsel %vm267, %v293, 0.0
        %v298 = vrot.slane %v297, 4
        %v299 = vadd.f32 %v297, %v298
        %v300 = vrot.slane %v299, 2
        %v301 = vadd.f32 %v299, %v300
        %v302 = vrot.slane %v301, 1
        %v303 = vadd.f32 %v301, %v302
        %v304 = vsel %vm267, %v294, 0.0
        %v305 = vrot.slane %v304, 4
        %v306 = vadd.f32 %v304, %v305
        %v307 = vrot.slane %v306, 2
        %v308 = vadd.f32 %v306, %v307
        %v309 = vrot.slane %v308, 1
        %v310 = vadd.f32 %v308, %v309
        %v311 = vmul.f32 %v303, %v288
        %v312 = vmul.f32 %v310, %v288
        %313 = vst [vmem:[#allocation1] ss:$2 sm:$0xff] %v259
        %v314 = vld.sshfl [vmem:[#allocation1] sm:$0xff pattern:$0x75316420]
        %v315 = vld.sshfl [vmem:[#allocation1 + $0x8] sm:$0xff pattern:$0x75316420]
        %v318 = vsel %vm267, %v314, -inf
        %v319 = vrot.slane %v318, 4
        %v320 = vmax.f32 %v318, %v319
        %v321 = vrot.slane %v320, 2
        %v322 = vmax.f32 %v320, %v321
        %v323 = vrot.slane %v322, 1
        %v324 = vmax.f32 %v322, %v323
        %v325 = vsel %vm267, %v315, -inf
        %v326 = vrot.slane %v325, 4
        %v327 = vmax.f32 %v325, %v326
        %v328 = vrot.slane %v327, 2
        %v329 = vmax.f32 %v327, %v328
        %v330 = vrot.slane %v329, 1
        %v331 = vmax.f32 %v329, %v330
        %332 = vst [vmem:[#allocation1] ss:$2 sm:$0xff] %v260
        %v333 = vld.sshfl [vmem:[#allocation1] sm:$0xff pattern:$0x75316420]
        %v334 = vld.sshfl [vmem:[#allocation1 + $0x8] sm:$0xff pattern:$0x75316420]
        %v337 = vsel %vm267, %v333, -inf
        %v338 = vrot.slane %v337, 4
        %v339 = vmax.f32 %v337, %v338
        %v340 = vrot.slane %v339, 2
        %v341 = vmax.f32 %v339, %v340
        %v342 = vrot.slane %v341, 1
        %v343 = vmax.f32 %v341, %v342
        %v344 = vsel %vm267, %v334, -inf
        %v345 = vrot.slane %v344, 4
        %v346 = vmax.f32 %v344, %v345
        %v347 = vrot.slane %v346, 2
        %v348 = vmax.f32 %v346, %v347
        %v349 = vrot.slane %v348, 1
        %v350 = vmax.f32 %v348, %v349
        %vm351 = vcmask 1040384
        %v352 = vsel %vm351, %v289, %v311
        %v353 = vsel %vm351, %v290, %v312
        %vm354 = vcmask 1041408
        %v355 = vsel %vm354, %v352, %v324
        %v356 = vsel %vm354, %v353, %v331
        %vm357 = vcmask 1042432
        %v358 = vsel %vm357, %v355, %v343
        %v359 = vsel %vm357, %v356, %v350
        %v360 = vld [vmem:[%s2] ss:$2 sm:$0x3]
        %s361 = scalar_lea.vmem %s2, 1
        %v362 = vld [vmem:[%s361] ss:$2 sm:$0x3]
        %v363 = vld [vmem:[%s0] sm:$0xf]
        %364 = vrot.lane.b32.xlu0 %v358, 3
        %v365 = vpop.permute.xlu0 %364
        %366 = vrot.lane.b32.xlu0 %v359, 3
        %v367 = vpop.permute.xlu0 %366
        %v368 = vlaneseq
        %v369 = vand.u32 %v368, 127
        %vm370 = vcmp.lt.s32.totalorder %v369, 3
        %v371 = vsel %vm370, %v365, %v367
        %v372 = vsel %vm370, %v367, %v365
        %v373 = vadd.f32 %v360, -3.0
        %vm374 = vcmp.ge.f32.partialorder %v373, 0.0
        %vm375 = vcmp.lt.f32.partialorder %v373, 16.0
        %vm376 = vmand %vm374, %vm375
        %v377 = vsel %vm376, 1, 0
        %v378 = vcvt.s32.f32 %v377
        %v380 = vperm.slane %v378, 0
        %v381 = vperm.slane %v378, 1
        %v384 = vmul.f32 %v372, %v380
        %v385 = vmul.f32 %v371, %v381
        %387 = vset.pattern.permute.xlu0 0
        %388 = vperm.xlu0 %387, %v363
        %v389 = vpop.permute.xlu0 %388
        %v391 = vmul.f32 %v384, %v389
        %v392 = vmul.f32 %v385, %v389
        %393 = vset.pattern.permute.xlu0 7
        %394 = vperm.xlu0 %393, %v363
        %v395 = vpop.permute.xlu0 %394
        %v397 = vmul.f32 %v384, %v395
        %v398 = vmul.f32 %v385, %v395
        %399 = vset.pattern.permute.xlu0 14
        %400 = vperm.xlu0 %399, %v363
        %v401 = vpop.permute.xlu0 %400
        %v403 = vmul.f32 %v384, %v401
        %v404 = vmul.f32 %v385, %v401
        %405 = vset.pattern.permute.xlu0 21
        %406 = vperm.xlu0 %405, %v363
        %v407 = vpop.permute.xlu0 %406
        %v409 = vmul.f32 %v384, %v407
        %v410 = vmul.f32 %v385, %v407
        %411 = vset.pattern.permute.xlu0 28
        %412 = vperm.xlu0 %411, %v363
        %v413 = vpop.permute.xlu0 %412
        %v415 = vmul.f32 %v384, %v413
        %v416 = vmul.f32 %v385, %v413
        %417 = vset.pattern.permute.xlu0 35
        %418 = vperm.xlu0 %417, %v363
        %v419 = vpop.permute.xlu0 %418
        %v421 = vmul.f32 %v384, %v419
        %v422 = vmul.f32 %v385, %v419
        %423 = vset.pattern.permute.xlu0 42
        %424 = vperm.xlu0 %423, %v363
        %v425 = vpop.permute.xlu0 %424
        %v427 = vmul.f32 %v384, %v425
        %v428 = vmul.f32 %v385, %v425
        %429 = vrot.lane.b32.xlu0 %v358, 2
        %v430 = vpop.permute.xlu0 %429
        %431 = vrot.lane.b32.xlu0 %v359, 2
        %v432 = vpop.permute.xlu0 %431
        %vm433 = vcmp.lt.s32.totalorder %v369, 2
        %v434 = vsel %vm433, %v430, %v432
        %v435 = vsel %vm433, %v432, %v430
        %v436 = vadd.f32 %v360, -2.0
        %vm437 = vcmp.ge.f32.partialorder %v436, 0.0
        %vm438 = vcmp.lt.f32.partialorder %v436, 16.0
        %vm439 = vmand %vm437, %vm438
        %v440 = vsel %vm439, 1, 0
        %v441 = vcvt.s32.f32 %v440
        %v443 = vperm.slane %v441, 0
        %v444 = vperm.slane %v441, 1
        %v447 = vmul.f32 %v435, %v443
        %v448 = vmul.f32 %v434, %v444
        %449 = vset.pattern.permute.xlu0 1
        %450 = vperm.xlu0 %449, %v363
        %v451 = vpop.permute.xlu0 %450
        %v453 = vmul.f32 %v447, %v451
        %v454 = vmul.f32 %v448, %v451
        %v455 = vadd.f32 %v391, %v453
        %v456 = vadd.f32 %v392, %v454
        %457 = vset.pattern.permute.xlu0 8
        %458 = vperm.xlu0 %457, %v363
        %v459 = vpop.permute.xlu0 %458
        %v461 = vmul.f32 %v447, %v459
        %v462 = vmul.f32 %v448, %v459
        %v463 = vadd.f32 %v397, %v461
        %v464 = vadd.f32 %v398, %v462
        %465 = vset.pattern.permute.xlu0 15
        %466 = vperm.xlu0 %465, %v363
        %v467 = vpop.permute.xlu0 %466
        %v469 = vmul.f32 %v447, %v467
        %v470 = vmul.f32 %v448, %v467
        %v471 = vadd.f32 %v403, %v469
        %v472 = vadd.f32 %v404, %v470
        %473 = vset.pattern.permute.xlu0 22
        %474 = vperm.xlu0 %473, %v363
        %v475 = vpop.permute.xlu0 %474
        %v477 = vmul.f32 %v447, %v475
        %v478 = vmul.f32 %v448, %v475
        %v479 = vadd.f32 %v409, %v477
        %v480 = vadd.f32 %v410, %v478
        %481 = vset.pattern.permute.xlu0 29
        %482 = vperm.xlu0 %481, %v363
        %v483 = vpop.permute.xlu0 %482
        %v485 = vmul.f32 %v447, %v483
        %v486 = vmul.f32 %v448, %v483
        %v487 = vadd.f32 %v415, %v485
        %v488 = vadd.f32 %v416, %v486
        %489 = vset.pattern.permute.xlu0 36
        %490 = vperm.xlu0 %489, %v363
        %v491 = vpop.permute.xlu0 %490
        %v493 = vmul.f32 %v447, %v491
        %v494 = vmul.f32 %v448, %v491
        %v495 = vadd.f32 %v421, %v493
        %v496 = vadd.f32 %v422, %v494
        %497 = vset.pattern.permute.xlu0 43
        %498 = vperm.xlu0 %497, %v363
        %v499 = vpop.permute.xlu0 %498
        %v501 = vmul.f32 %v447, %v499
        %v502 = vmul.f32 %v448, %v499
        %v503 = vadd.f32 %v427, %v501
        %v504 = vadd.f32 %v428, %v502
        %505 = vrot.lane.b32.xlu0 %v358, 1
        %v506 = vpop.permute.xlu0 %505
        %507 = vrot.lane.b32.xlu0 %v359, 1
        %v508 = vpop.permute.xlu0 %507
        %vm509 = vcmp.lt.s32.totalorder %v369, 1
        %v510 = vsel %vm509, %v506, %v508
        %v511 = vsel %vm509, %v508, %v506
        %v512 = vadd.f32 %v360, -1.0
        %vm513 = vcmp.ge.f32.partialorder %v512, 0.0
        %vm514 = vcmp.lt.f32.partialorder %v512, 16.0
        %vm515 = vmand %vm513, %vm514
        %v516 = vsel %vm515, 1, 0
        %v517 = vcvt.s32.f32 %v516
        %v519 = vperm.slane %v517, 0
        %v520 = vperm.slane %v517, 1
        %v523 = vmul.f32 %v511, %v519
        %v524 = vmul.f32 %v510, %v520
        %525 = vset.pattern.permute.xlu0 2
        %526 = vperm.xlu0 %525, %v363
        %v527 = vpop.permute.xlu0 %526
        %v529 = vmul.f32 %v523, %v527
        %v530 = vmul.f32 %v524, %v527
        %v531 = vadd.f32 %v455, %v529
        %v532 = vadd.f32 %v456, %v530
        %533 = vset.pattern.permute.xlu0 9
        %534 = vperm.xlu0 %533, %v363
        %v535 = vpop.permute.xlu0 %534
        %v537 = vmul.f32 %v523, %v535
        %v538 = vmul.f32 %v524, %v535
        %v539 = vadd.f32 %v463, %v537
        %v540 = vadd.f32 %v464, %v538
        %541 = vset.pattern.permute.xlu0 16
        %542 = vperm.xlu0 %541, %v363
        %v543 = vpop.permute.xlu0 %542
        %v545 = vmul.f32 %v523, %v543
        %v546 = vmul.f32 %v524, %v543
        %v547 = vadd.f32 %v471, %v545
        %v548 = vadd.f32 %v472, %v546
        %549 = vset.pattern.permute.xlu0 23
        %550 = vperm.xlu0 %549, %v363
        %v551 = vpop.permute.xlu0 %550
        %v553 = vmul.f32 %v523, %v551
        %v554 = vmul.f32 %v524, %v551
        %v555 = vadd.f32 %v479, %v553
        %v556 = vadd.f32 %v480, %v554
        %557 = vset.pattern.permute.xlu0 30
        %558 = vperm.xlu0 %557, %v363
        %v559 = vpop.permute.xlu0 %558
        %v561 = vmul.f32 %v523, %v559
        %v562 = vmul.f32 %v524, %v559
        %v563 = vadd.f32 %v487, %v561
        %v564 = vadd.f32 %v488, %v562
        %565 = vset.pattern.permute.xlu0 37
        %566 = vperm.xlu0 %565, %v363
        %v567 = vpop.permute.xlu0 %566
        %v569 = vmul.f32 %v523, %v567
        %v570 = vmul.f32 %v524, %v567
        %v571 = vadd.f32 %v495, %v569
        %v572 = vadd.f32 %v496, %v570
        %573 = vset.pattern.permute.xlu0 44
        %574 = vperm.xlu0 %573, %v363
        %v575 = vpop.permute.xlu0 %574
        %v577 = vmul.f32 %v523, %v575
        %v578 = vmul.f32 %v524, %v575
        %v579 = vadd.f32 %v503, %v577
        %v580 = vadd.f32 %v504, %v578
        %581 = vset.pattern.permute.xlu0 3
        %582 = vperm.xlu0 %581, %v363
        %v583 = vpop.permute.xlu0 %582
        %v585 = vmul.f32 %v358, %v583
        %v586 = vmul.f32 %v359, %v583
        %v587 = vadd.f32 %v531, %v585
        %v588 = vadd.f32 %v532, %v586
        %589 = vset.pattern.permute.xlu0 10
        %590 = vperm.xlu0 %589, %v363
        %v591 = vpop.permute.xlu0 %590
        %v593 = vmul.f32 %v358, %v591
        %v594 = vmul.f32 %v359, %v591
        %v595 = vadd.f32 %v539, %v593
        %v596 = vadd.f32 %v540, %v594
        %597 = vset.pattern.permute.xlu0 17
        %598 = vperm.xlu0 %597, %v363
        %v599 = vpop.permute.xlu0 %598
        %v601 = vmul.f32 %v358, %v599
        %v602 = vmul.f32 %v359, %v599
        %v603 = vadd.f32 %v547, %v601
        %v604 = vadd.f32 %v548, %v602
        %605 = vset.pattern.permute.xlu0 24
        %606 = vperm.xlu0 %605, %v363
        %v607 = vpop.permute.xlu0 %606
        %v609 = vmul.f32 %v358, %v607
        %v610 = vmul.f32 %v359, %v607
        %v611 = vadd.f32 %v555, %v609
        %v612 = vadd.f32 %v556, %v610
        %613 = vset.pattern.permute.xlu0 31
        %614 = vperm.xlu0 %613, %v363
        %v615 = vpop.permute.xlu0 %614
        %v617 = vmul.f32 %v358, %v615
        %v618 = vmul.f32 %v359, %v615
        %v619 = vadd.f32 %v563, %v617
        %v620 = vadd.f32 %v564, %v618
        %621 = vset.pattern.permute.xlu0 38
        %622 = vperm.xlu0 %621, %v363
        %v623 = vpop.permute.xlu0 %622
        %v625 = vmul.f32 %v358, %v623
        %v626 = vmul.f32 %v359, %v623
        %v627 = vadd.f32 %v571, %v625
        %v628 = vadd.f32 %v572, %v626
        %629 = vset.pattern.permute.xlu0 45
        %630 = vperm.xlu0 %629, %v363
        %v631 = vpop.permute.xlu0 %630
        %v633 = vmul.f32 %v358, %v631
        %v634 = vmul.f32 %v359, %v631
        %v635 = vadd.f32 %v579, %v633
        %v636 = vadd.f32 %v580, %v634
        %637 = vrot.lane.b32.xlu0 %v358, 127
        %v638 = vpop.permute.xlu0 %637
        %639 = vrot.lane.b32.xlu0 %v359, 127
        %v640 = vpop.permute.xlu0 %639
        %vm641 = vcmp.lt.s32.totalorder %v369, 127
        %v642 = vsel %vm641, %v638, %v640
        %v643 = vsel %vm641, %v640, %v638
        %v644 = vadd.f32 %v360, 1.0
        %vm645 = vcmp.ge.f32.partialorder %v644, 0.0
        %vm646 = vcmp.lt.f32.partialorder %v644, 16.0
        %vm647 = vmand %vm645, %vm646
        %v648 = vsel %vm647, 1, 0
        %v649 = vcvt.s32.f32 %v648
        %v651 = vperm.slane %v649, 0
        %v652 = vperm.slane %v649, 1
        %v655 = vmul.f32 %v642, %v651
        %v656 = vmul.f32 %v643, %v652
        %657 = vset.pattern.permute.xlu0 4
        %658 = vperm.xlu0 %657, %v363
        %v659 = vpop.permute.xlu0 %658
        %v661 = vmul.f32 %v655, %v659
        %v662 = vmul.f32 %v656, %v659
        %v663 = vadd.f32 %v587, %v661
        %v664 = vadd.f32 %v588, %v662
        %665 = vset.pattern.permute.xlu0 11
        %666 = vperm.xlu0 %665, %v363
        %v667 = vpop.permute.xlu0 %666
        %v669 = vmul.f32 %v655, %v667
        %v670 = vmul.f32 %v656, %v667
        %v671 = vadd.f32 %v595, %v669
        %v672 = vadd.f32 %v596, %v670
        %673 = vset.pattern.permute.xlu0 18
        %674 = vperm.xlu0 %673, %v363
        %v675 = vpop.permute.xlu0 %674
        %v677 = vmul.f32 %v655, %v675
        %v678 = vmul.f32 %v656, %v675
        %v679 = vadd.f32 %v603, %v677
        %v680 = vadd.f32 %v604, %v678
        %681 = vset.pattern.permute.xlu0 25
        %682 = vperm.xlu0 %681, %v363
        %v683 = vpop.permute.xlu0 %682
        %v685 = vmul.f32 %v655, %v683
        %v686 = vmul.f32 %v656, %v683
        %v687 = vadd.f32 %v611, %v685
        %v688 = vadd.f32 %v612, %v686
        %689 = vset.pattern.permute.xlu0 32
        %690 = vperm.xlu0 %689, %v363
        %v691 = vpop.permute.xlu0 %690
        %v693 = vmul.f32 %v655, %v691
        %v694 = vmul.f32 %v656, %v691
        %v695 = vadd.f32 %v619, %v693
        %v696 = vadd.f32 %v620, %v694
        %697 = vset.pattern.permute.xlu0 39
        %698 = vperm.xlu0 %697, %v363
        %v699 = vpop.permute.xlu0 %698
        %v701 = vmul.f32 %v655, %v699
        %v702 = vmul.f32 %v656, %v699
        %v703 = vadd.f32 %v627, %v701
        %v704 = vadd.f32 %v628, %v702
        %705 = vset.pattern.permute.xlu0 46
        %706 = vperm.xlu0 %705, %v363
        %v707 = vpop.permute.xlu0 %706
        %v709 = vmul.f32 %v655, %v707
        %v710 = vmul.f32 %v656, %v707
        %v711 = vadd.f32 %v635, %v709
        %v712 = vadd.f32 %v636, %v710
        %713 = vrot.lane.b32.xlu0 %v358, 126
        %v714 = vpop.permute.xlu0 %713
        %715 = vrot.lane.b32.xlu0 %v359, 126
        %v716 = vpop.permute.xlu0 %715
        %vm717 = vcmp.lt.s32.totalorder %v369, 126
        %v718 = vsel %vm717, %v714, %v716
        %v719 = vsel %vm717, %v716, %v714
        %v720 = vadd.f32 %v360, 2.0
        %vm721 = vcmp.ge.f32.partialorder %v720, 0.0
        %vm722 = vcmp.lt.f32.partialorder %v720, 16.0
        %vm723 = vmand %vm721, %vm722
        %v724 = vsel %vm723, 1, 0
        %v725 = vcvt.s32.f32 %v724
        %v727 = vperm.slane %v725, 0
        %v728 = vperm.slane %v725, 1
        %v731 = vmul.f32 %v718, %v727
        %v732 = vmul.f32 %v719, %v728
        %733 = vset.pattern.permute.xlu0 5
        %734 = vperm.xlu0 %733, %v363
        %v735 = vpop.permute.xlu0 %734
        %v737 = vmul.f32 %v731, %v735
        %v738 = vmul.f32 %v732, %v735
        %v739 = vadd.f32 %v663, %v737
        %v740 = vadd.f32 %v664, %v738
        %741 = vset.pattern.permute.xlu0 12
        %742 = vperm.xlu0 %741, %v363
        %v743 = vpop.permute.xlu0 %742
        %v745 = vmul.f32 %v731, %v743
        %v746 = vmul.f32 %v732, %v743
        %v747 = vadd.f32 %v671, %v745
        %v748 = vadd.f32 %v672, %v746
        %749 = vset.pattern.permute.xlu0 19
        %750 = vperm.xlu0 %749, %v363
        %v751 = vpop.permute.xlu0 %750
        %v753 = vmul.f32 %v731, %v751
        %v754 = vmul.f32 %v732, %v751
        %v755 = vadd.f32 %v679, %v753
        %v756 = vadd.f32 %v680, %v754
        %757 = vset.pattern.permute.xlu0 26
        %758 = vperm.xlu0 %757, %v363
        %v759 = vpop.permute.xlu0 %758
        %v761 = vmul.f32 %v731, %v759
        %v762 = vmul.f32 %v732, %v759
        %v763 = vadd.f32 %v687, %v761
        %v764 = vadd.f32 %v688, %v762
        %765 = vset.pattern.permute.xlu0 33
        %766 = vperm.xlu0 %765, %v363
        %v767 = vpop.permute.xlu0 %766
        %v769 = vmul.f32 %v731, %v767
        %v770 = vmul.f32 %v732, %v767
        %v771 = vadd.f32 %v695, %v769
        %v772 = vadd.f32 %v696, %v770
        %773 = vset.pattern.permute.xlu0 40
        %774 = vperm.xlu0 %773, %v363
        %v775 = vpop.permute.xlu0 %774
        %v777 = vmul.f32 %v731, %v775
        %v778 = vmul.f32 %v732, %v775
        %v779 = vadd.f32 %v703, %v777
        %v780 = vadd.f32 %v704, %v778
        %781 = vset.pattern.permute.xlu0 47
        %782 = vperm.xlu0 %781, %v363
        %v783 = vpop.permute.xlu0 %782
        %v785 = vmul.f32 %v731, %v783
        %v786 = vmul.f32 %v732, %v783
        %v787 = vadd.f32 %v711, %v785
        %v788 = vadd.f32 %v712, %v786
        %789 = vrot.lane.b32.xlu0 %v358, 125
        %v790 = vpop.permute.xlu0 %789
        %791 = vrot.lane.b32.xlu0 %v359, 125
        %v792 = vpop.permute.xlu0 %791
        %vm793 = vcmp.lt.s32.totalorder %v369, 125
        %v794 = vsel %vm793, %v790, %v792
        %v795 = vsel %vm793, %v792, %v790
        %v796 = vadd.f32 %v360, 3.0
        %vm797 = vcmp.ge.f32.partialorder %v796, 0.0
        %vm798 = vcmp.lt.f32.partialorder %v796, 16.0
        %vm799 = vmand %vm797, %vm798
        %v800 = vsel %vm799, 1, 0
        %v801 = vcvt.s32.f32 %v800
        %v803 = vperm.slane %v801, 0
        %v804 = vperm.slane %v801, 1
        %v807 = vmul.f32 %v794, %v803
        %v808 = vmul.f32 %v795, %v804
        %809 = vset.pattern.permute.xlu0 6
        %810 = vperm.xlu0 %809, %v363
        %v811 = vpop.permute.xlu0 %810
        %v813 = vmul.f32 %v807, %v811
        %v814 = vmul.f32 %v808, %v811
        %v815 = vadd.f32 %v739, %v813
        %v816 = vadd.f32 %v740, %v814
        %817 = vset.pattern.permute.xlu0 13
        %818 = vperm.xlu0 %817, %v363
        %v819 = vpop.permute.xlu0 %818
        %v821 = vmul.f32 %v807, %v819
        %v822 = vmul.f32 %v808, %v819
        %v823 = vadd.f32 %v747, %v821
        %v824 = vadd.f32 %v748, %v822
        %825 = vset.pattern.permute.xlu0 20
        %826 = vperm.xlu0 %825, %v363
        %v827 = vpop.permute.xlu0 %826
        %v829 = vmul.f32 %v807, %v827
        %v830 = vmul.f32 %v808, %v827
        %v831 = vadd.f32 %v755, %v829
        %v832 = vadd.f32 %v756, %v830
        %833 = vset.pattern.permute.xlu0 27
        %834 = vperm.xlu0 %833, %v363
        %v835 = vpop.permute.xlu0 %834
        %v837 = vmul.f32 %v807, %v835
        %v838 = vmul.f32 %v808, %v835
        %v839 = vadd.f32 %v763, %v837
        %v840 = vadd.f32 %v764, %v838
        %841 = vset.pattern.permute.xlu0 34
        %842 = vperm.xlu0 %841, %v363
        %v843 = vpop.permute.xlu0 %842
        %v845 = vmul.f32 %v807, %v843
        %v846 = vmul.f32 %v808, %v843
        %v847 = vadd.f32 %v771, %v845
        %v848 = vadd.f32 %v772, %v846
        %849 = vset.pattern.permute.xlu0 41
        %850 = vperm.xlu0 %849, %v363
        %v851 = vpop.permute.xlu0 %850
        %v853 = vmul.f32 %v807, %v851
        %v854 = vmul.f32 %v808, %v851
        %v855 = vadd.f32 %v779, %v853
        %v856 = vadd.f32 %v780, %v854
        %857 = vset.pattern.permute.xlu0 48
        %858 = vperm.xlu0 %857, %v363
        %v859 = vpop.permute.xlu0 %858
        %v861 = vmul.f32 %v807, %v859
        %v862 = vmul.f32 %v808, %v859
        %v863 = vadd.f32 %v787, %v861
        %v864 = vadd.f32 %v788, %v862
        %v867 = vrot.slane %v815, 2
        %v868 = vrot.slane %v816, 2
        %v871 = vadd.f32 %v815, %v867
        %v872 = vadd.f32 %v816, %v868
        %873 = vrot.lane.b32.xlu0 %v871, 48
        %v874 = vpop.permute.xlu0 %873
        %875 = vrot.lane.b32.xlu0 %v872, 48
        %v876 = vpop.permute.xlu0 %875
        %vm877 = vcmp.lt.s32.totalorder %v369, 48
        %v878 = vsel %vm877, %v874, %v876
        %v879 = vsel %vm877, %v876, %v874
        %v880 = vadd.f32 %v362, -3.0
        %vm881 = vcmp.ge.f32.partialorder %v880, 0.0
        %vm882 = vcmp.lt.f32.partialorder %v880, 16.0
        %vm883 = vmand %vm881, %vm882
        %v884 = vsel %vm883, 1, 0
        %v885 = vcvt.s32.f32 %v884
        %v887 = vperm.slane %v885, 0
        %v888 = vperm.slane %v885, 1
        %v891 = vmul.f32 %v879, %v887
        %v892 = vmul.f32 %v878, %v888
        %v895 = vrot.slane %v823, 2
        %v896 = vrot.slane %v824, 2
        %v899 = vadd.f32 %v823, %v895
        %v900 = vadd.f32 %v824, %v896
        %901 = vrot.lane.b32.xlu0 %v899, 32
        %v902 = vpop.permute.xlu0 %901
        %903 = vrot.lane.b32.xlu0 %v900, 32
        %v904 = vpop.permute.xlu0 %903
        %vm905 = vcmp.lt.s32.totalorder %v369, 32
        %v906 = vsel %vm905, %v902, %v904
        %v907 = vsel %vm905, %v904, %v902
        %v908 = vadd.f32 %v362, -2.0
        %vm909 = vcmp.ge.f32.partialorder %v908, 0.0
        %vm910 = vcmp.lt.f32.partialorder %v908, 16.0
        %vm911 = vmand %vm909, %vm910
        %v912 = vsel %vm911, 1, 0
        %v913 = vcvt.s32.f32 %v912
        %v915 = vperm.slane %v913, 0
        %v916 = vperm.slane %v913, 1
        %v919 = vmul.f32 %v907, %v915
        %v920 = vmul.f32 %v906, %v916
        %v921 = vadd.f32 %v891, %v919
        %v922 = vadd.f32 %v892, %v920
        %v925 = vrot.slane %v831, 2
        %v926 = vrot.slane %v832, 2
        %v929 = vadd.f32 %v831, %v925
        %v930 = vadd.f32 %v832, %v926
        %931 = vrot.lane.b32.xlu0 %v929, 16
        %v932 = vpop.permute.xlu0 %931
        %933 = vrot.lane.b32.xlu0 %v930, 16
        %v934 = vpop.permute.xlu0 %933
        %vm935 = vcmp.lt.s32.totalorder %v369, 16
        %v936 = vsel %vm935, %v932, %v934
        %v937 = vsel %vm935, %v934, %v932
        %v938 = vadd.f32 %v362, -1.0
        %vm939 = vcmp.ge.f32.partialorder %v938, 0.0
        %vm940 = vcmp.lt.f32.partialorder %v938, 16.0
        %vm941 = vmand %vm939, %vm940
        %v942 = vsel %vm941, 1, 0
        %v943 = vcvt.s32.f32 %v942
        %v945 = vperm.slane %v943, 0
        %v946 = vperm.slane %v943, 1
        %v949 = vmul.f32 %v937, %v945
        %v950 = vmul.f32 %v936, %v946
        %v951 = vadd.f32 %v921, %v949
        %v952 = vadd.f32 %v922, %v950
        %v955 = vrot.slane %v839, 2
        %v956 = vrot.slane %v840, 2
        %v959 = vadd.f32 %v839, %v955
        %v960 = vadd.f32 %v840, %v956
        %v961 = vadd.f32 %v951, %v959
        %v962 = vadd.f32 %v952, %v960
        %v965 = vrot.slane %v847, 2
        %v966 = vrot.slane %v848, 2
        %v969 = vadd.f32 %v847, %v965
        %v970 = vadd.f32 %v848, %v966
        %971 = vrot.lane.b32.xlu0 %v969, 112
        %v972 = vpop.permute.xlu0 %971
        %973 = vrot.lane.b32.xlu0 %v970, 112
        %v974 = vpop.permute.xlu0 %973
        %vm975 = vcmp.lt.s32.totalorder %v369, 112
        %v976 = vsel %vm975, %v972, %v974
        %v977 = vsel %vm975, %v974, %v972
        %v978 = vadd.f32 %v362, 1.0
        %vm979 = vcmp.ge.f32.partialorder %v978, 0.0
        %vm980 = vcmp.lt.f32.partialorder %v978, 16.0
        %vm981 = vmand %vm979, %vm980
        %v982 = vsel %vm981, 1, 0
        %v983 = vcvt.s32.f32 %v982
        %v985 = vperm.slane %v983, 0
        %v986 = vperm.slane %v983, 1
        %v989 = vmul.f32 %v976, %v985
        %v990 = vmul.f32 %v977, %v986
        %v991 = vadd.f32 %v961, %v989
        %v992 = vadd.f32 %v962, %v990
        %v995 = vrot.slane %v855, 2
        %v996 = vrot.slane %v856, 2
        %v999 = vadd.f32 %v855, %v995
        %v1000 = vadd.f32 %v856, %v996
        %1001 = vrot.lane.b32.xlu0 %v999, 96
        %v1002 = vpop.permute.xlu0 %1001
        %1003 = vrot.lane.b32.xlu0 %v1000, 96
        %v1004 = vpop.permute.xlu0 %1003
        %vm1005 = vcmp.lt.s32.totalorder %v369, 96
        %v1006 = vsel %vm1005, %v1002, %v1004
        %v1007 = vsel %vm1005, %v1004, %v1002
        %v1008 = vadd.f32 %v362, 2.0
        %vm1009 = vcmp.ge.f32.partialorder %v1008, 0.0
        %vm1010 = vcmp.lt.f32.partialorder %v1008, 16.0
        %vm1011 = vmand %vm1009, %vm1010
        %v1012 = vsel %vm1011, 1, 0
        %v1013 = vcvt.s32.f32 %v1012
        %v1015 = vperm.slane %v1013, 0
        %v1016 = vperm.slane %v1013, 1
        %v1019 = vmul.f32 %v1006, %v1015
        %v1020 = vmul.f32 %v1007, %v1016
        %v1021 = vadd.f32 %v991, %v1019
        %v1022 = vadd.f32 %v992, %v1020
        %v1025 = vrot.slane %v863, 2
        %v1026 = vrot.slane %v864, 2
        %v1029 = vadd.f32 %v863, %v1025
        %v1030 = vadd.f32 %v864, %v1026
        %1031 = vrot.lane.b32.xlu0 %v1029, 80
        %v1032 = vpop.permute.xlu0 %1031
        %1033 = vrot.lane.b32.xlu0 %v1030, 80
        %v1034 = vpop.permute.xlu0 %1033
        %vm1035 = vcmp.lt.s32.totalorder %v369, 80
        %v1036 = vsel %vm1035, %v1032, %v1034
        %v1037 = vsel %vm1035, %v1034, %v1032
        %v1038 = vadd.f32 %v362, 3.0
        %vm1039 = vcmp.ge.f32.partialorder %v1038, 0.0
        %vm1040 = vcmp.lt.f32.partialorder %v1038, 16.0
        %vm1041 = vmand %vm1039, %vm1040
        %v1042 = vsel %vm1041, 1, 0
        %v1043 = vcvt.s32.f32 %v1042
        %v1045 = vperm.slane %v1043, 0
        %v1046 = vperm.slane %v1043, 1
        %v1049 = vmul.f32 %v1036, %v1045
        %v1050 = vmul.f32 %v1037, %v1046
        %v1051 = vadd.f32 %v1021, %v1049
        %v1052 = vadd.f32 %v1022, %v1050
        %s1053 = sld [smem:[#allocation2]]
        %v1054 = vstv %s1053
        %v1055 = vadd.f32 %v1051, %v1054
        %v1056 = vadd.f32 %v1052, %v1054
        %v1057 = vxor.u32 %v1055, 2147483648
        %v1058 = vxor.u32 %v1056, 2147483648
        %v1059 = vmul.f32 %v1057, 1.442695
        %v1060 = vpow.pop %v1059
        %v1061 = vmul.f32 %v1058, 1.442695
        %v1062 = vpow.pop %v1061
        %v1063 = vadd.f32 %v1060, 1.0
        %v1064 = vadd.f32 %v1062, 1.0
        %v1065 = vrcp.pop %v1063
        %v1066 = vmul.f32 %v1063, %v1065
        %v1067 = vsub.f32 1.0, %v1066
        %v1068 = vmul.f32 %v1065, %v1067
        %v1069 = vadd.f32 %v1065, %v1068
        %vm1070 = vweird.f32 %v1063
        %vm1071 = vweird.f32 %v1065
        %vm1072 = vmor %vm1070, %vm1071
        %v1073 = vsel %vm1072, %v1065, %v1069
        %v1074 = vand.u32 2147483647, %v1063
        %vm1075 = vcmp.eq.f32.partialorder %v1074, 8.507059e+37
        %v1076 = vand.u32 %v1063, 2147483648
        %v1077 = vor.u32 1.1754944e-38, %v1076
        %v1078 = vsel %vm1075, %v1077, %v1073
        %v1079 = vmul.f32 1.0, %v1078
        %v1080 = vrcp.pop %v1064
        %v1081 = vmul.f32 %v1064, %v1080
        %v1082 = vsub.f32 1.0, %v1081
        %v1083 = vmul.f32 %v1080, %v1082
        %v1084 = vadd.f32 %v1080, %v1083
        %vm1085 = vweird.f32 %v1064
        %vm1086 = vweird.f32 %v1080
        %vm1087 = vmor %vm1085, %vm1086
        %v1088 = vsel %vm1087, %v1080, %v1084
        %v1089 = vand.u32 2147483647, %v1064
        %vm1090 = vcmp.eq.f32.partialorder %v1089, 8.507059e+37
        %v1091 = vand.u32 %v1064, 2147483648
        %v1092 = vor.u32 1.1754944e-38, %v1091
        %v1093 = vsel %vm1090, %v1092, %v1088
        %v1094 = vmul.f32 1.0, %v1093
        %s1095 = sld [smem:[#allocation2 + $0x1]]
        %v1096 = vstv %s1095
        %v1097 = vadd.f32 %v1051, %v1096
        %v1098 = vadd.f32 %v1052, %v1096
        %v1099 = vxor.u32 %v1097, 2147483648
        %v1100 = vxor.u32 %v1098, 2147483648
        %v1101 = vmul.f32 %v1099, 1.442695
        %v1102 = vpow.pop %v1101
        %v1103 = vmul.f32 %v1100, 1.442695
        %v1104 = vpow.pop %v1103
        %v1105 = vadd.f32 %v1102, 1.0
        %v1106 = vadd.f32 %v1104, 1.0
        %v1107 = vrcp.pop %v1105
        %v1108 = vmul.f32 %v1105, %v1107
        %v1109 = vsub.f32 1.0, %v1108
        %v1110 = vmul.f32 %v1107, %v1109
        %v1111 = vadd.f32 %v1107, %v1110
        %vm1112 = vweird.f32 %v1105
        %vm1113 = vweird.f32 %v1107
        %vm1114 = vmor %vm1112, %vm1113
        %v1115 = vsel %vm1114, %v1107, %v1111
        %v1116 = vand.u32 2147483647, %v1105
        %vm1117 = vcmp.eq.f32.partialorder %v1116, 8.507059e+37
        %v1118 = vand.u32 %v1105, 2147483648
        %v1119 = vor.u32 1.1754944e-38, %v1118
        %v1120 = vsel %vm1117, %v1119, %v1115
        %v1121 = vmul.f32 1.0, %v1120
        %v1122 = vrcp.pop %v1106
        %v1123 = vmul.f32 %v1106, %v1122
        %v1124 = vsub.f32 1.0, %v1123
        %v1125 = vmul.f32 %v1122, %v1124
        %v1126 = vadd.f32 %v1122, %v1125
        %vm1127 = vweird.f32 %v1106
        %vm1128 = vweird.f32 %v1122
        %vm1129 = vmor %vm1127, %vm1128
        %v1130 = vsel %vm1129, %v1122, %v1126
        %v1131 = vand.u32 2147483647, %v1106
        %vm1132 = vcmp.eq.f32.partialorder %v1131, 8.507059e+37
        %v1133 = vand.u32 %v1106, 2147483648
        %v1134 = vor.u32 1.1754944e-38, %v1133
        %v1135 = vsel %vm1132, %v1134, %v1130
        %v1136 = vmul.f32 1.0, %v1135
        %v1137 = vperm.slane %v1079, 0
        %v1138 = vperm.slane %v1094, 0
        %v1141 = vrot.slane %v1138, 4
        %v1142 = vsel %vm267, %v1137, %v1141
        %v1144 = vmul.f32 %v259, %v1142
        %v1145 = vperm.slane %v1121, 1
        %v1146 = vperm.slane %v1136, 1
        %v1149 = vrot.slane %v1146, 4
        %v1150 = vsel %vm267, %v1145, %v1149
        %v1152 = vmul.f32 %v260, %v1150
        %v1153 = vadd.f32 %v1144, %v1152
        %1154 = vst [vmem:[%s258] sm:$0xff] %v1153
        %p1155 = scmp.lt.s32.totalorder %s17, 1
        %s1156 = scalar_select %p1155, %s17, 1
        %s1157 = smul.addr %s1156, 2
        %s1158 = smul.addr %s1157, 4
        %s1159 = scalar_lea.vmem %s5, %s1158
        // Predicated region
        $region45: #{ssa_pallas.1} parent=39 // pred_check
          %p1160 = pneg %p150
        $region46: #{ssa_pallas.1} parent=39 // pred_check_branch
          %1162 = sbr.rel (%p1160) target = $region48
        $region47: #{ssa_pallas.1} parent=39 // pred_region
          _
        $region48: #{ssa_pallas.1} parent=39 // pred_fallthru
          _
      $region40: #{ssa_pallas.1} parent=5 // pred_fallthru
        _
      %p1163 = scmp.le.s32.totalorder 2, %s12
      // Predicated region
      $region49: #{ssa_pallas.1} parent=5 // pred_check
        %p1164 = pneg %p1163
      $region50: #{ssa_pallas.1} parent=5 // pred_check_branch
        %1166 = sbr.rel (%p1164) target = $region52
      $region51: #{ssa_pallas.1} parent=5 // pred_region
        %s1167 = ssub.s32 %s12, 2
        // Predicated region
        $region53: #{ssa_pallas.1} parent=51 // pred_check
          %p1168 = pneg %p156
        $region54: #{ssa_pallas.1} parent=51 // pred_check_branch
          %1170 = sbr.rel (%p1168) target = $region56
        $region55: #{ssa_pallas.1} parent=51 // pred_region
          %p1171 = scmp.lt.s32.totalorder %s18, 1
          %s1172 = scalar_select %p1171, %s18, 1
          %s1173 = smul.addr %s1172, 2
          %s1174 = smul.addr %s1173, 4
          %s1175 = scalar_lea.vmem %s5, %s1174
        $region56: #{ssa_pallas.1} parent=51 // pred_fallthru
          _
      $region52: #{ssa_pallas.1} parent=5 // pred_fallthru
        _
    $region6: #{ssa_pallas.1} parent=1 // loop_footer
      %s16 = sadd.s32 1, %s12
    $region7: #{ssa_pallas.1} parent=1 // loop_footer_branch
      %11 = sbr.rel target = $region3
    $region8: #{ssa_pallas.1} parent=1 // loop_exit
      _
    %1176 = vsyncpa [#allocation3], 1
    %s1177 = scalar_lea.sflag [#allocation3], 1
    %1178 = vsyncpa %s1177, 1

</llo_original>
